<compile_context>
chip_gen: v5e
topology: v5e:2x2
jax: 0.10.0
libtpu: 0.0.40
codegen_flags: <defaults>
</compile_context>

<pallas_src>
import functools

import numpy as np
import jax
import jax.numpy as jnp
from jax.experimental import pallas as pl
from jax.experimental.pallas import tpu as pltpu


# ---------------------------------------------------------------------------- helpers
def _const_spec(shape):
    zeros = (0,) * len(shape)
    return pl.BlockSpec(shape, lambda *_: zeros)


def _leaky_relu(x, slope=0.2):
    return jnp.where(x >= 0, x, slope * x)


def _vmem_budget_bytes():
    # Generation-aware VMEM budget with headroom (v7x: ~48 MiB of 64; v5e/v6e: ~96 of 128).
    try:
        cap = int(pltpu.get_tpu_info().vmem_capacity_bytes)
    except Exception:
        cap = 64 * 1024 * 1024
    return (cap * 3) // 4


def _group_norm_cp(h, num_groups, gamma, beta, eps=1e-5):
    """GroupNorm on (C, P) activations, PyTorch semantics.
    One lane-reduction pass for per-channel sum/sum-sq, tiny per-group scalar math,
    then a single FMA pass.  No full-plane concat, no per-group passes over the plane."""
    C, P = h.shape
    cg = C // num_groups
    n = cg * P
    s1 = jnp.sum(h, axis=1, keepdims=True)          # (C, 1)
    s2 = jnp.sum(h * h, axis=1, keepdims=True)      # (C, 1)
    scale_rows, shift_rows = [], []
    for g in range(num_groups):                     # loop over tiny (cg,1) stats only
        sl = slice(g * cg, (g + 1) * cg)
        mu = jnp.sum(s1[sl]) / n
        var = jnp.sum(s2[sl]) / n - mu * mu
        inv = jax.lax.rsqrt(var + eps)
        sc = gamma[sl] * inv                        # (cg, 1)
        scale_rows.append(sc)
        shift_rows.append(beta[sl] - mu * sc)
    scale_c = jnp.concatenate(scale_rows, axis=0)   # (C, 1) -- tiny
    shift_c = jnp.concatenate(shift_rows, axis=0)
    return h * scale_c + shift_c


def _source_amp_map(H, W, src):
    # SourceAmplitude depends only on (H, W) and its parameters -> hoisted out of kernel.
    sigmas, x_s, y_s, amps, dc = src
    x_dim = jnp.linspace(-(W - 1) / 2, (W - 1) / 2, W)
    y_dim = jnp.linspace(-(H - 1) / 2, (H - 1) / 2, H)
    xg = jnp.exp(-0.5 * ((x_dim[None, :] - x_s[:, None]) / sigmas[:, None]) ** 2)   # (G, W)
    yg = jnp.exp(-0.5 * ((y_dim[None, :] - y_s[:, None]) / sigmas[:, None]) ** 2)   # (G, H)
    amp = dc[0] + jnp.einsum("g,gh,gw->hw", amps, yg, xg)
    return amp.astype(jnp.float32)                                                   # (H, W)


def _conv_tap_masks(H, W):
    # Boundary masks for the flattened-pixel 3x3 SAME (zero-padded) conv.
    P = H * W
    y = np.arange(P) // W
    x = np.arange(P) % W
    masks = []
    for dy in (-1, 0, 1):
        for dx in (-1, 0, 1):
            m = (y + dy >= 0) & (y + dy < H) & (x + dx >= 0) & (x + dx < W)
            masks.append(m.astype(np.float32))
    return jnp.asarray(np.stack(masks, 0))                                           # (9, P)


def _pick_tile(n, target):
    """Largest divisor of n that is a multiple of 8 and <= target; else n (full extent)."""
    if n <= target:
        return n
    for t in range(int(target), 7, -1):
        if n % t == 0 and t % 8 == 0:
            return t
    return n


# ---------------------------------------------------------------------------- Kernel 1: LCM + SourceAmplitude + polar_to_rect (fused)
def _lcm_src_polar_kernel(ph_ref, lat_ref, amp_ref,
                          w1p, w1l, b1, g1w, g1b, w2, b2, g2w, g2b, w3, b3,
                          re_ref, im_ref):
    # ph_ref: (1,1,P) phase, lat_ref: (2,P) latent code (batch-invariant),
    # amp_ref: (1,P) precomputed source amplitude.  Channels on sublanes, pixels on lanes.
    ph = ph_ref[0]                                                   # (1, P)
    lat = lat_ref[...]                                               # (2, P)
    w1lv = w1l[...]                                                  # (16, 2)
    # layer 0 (1x1 conv, [phase; latent] -> 16) without materializing a (3, P) concat:
    h = (w1p[...] * ph
         + w1lv[:, 0:1] * lat[0:1, :]
         + w1lv[:, 1:2] * lat[1:2, :]
         + b1[...])                                                  # (16, P)
    h = _leaky_relu(_group_norm_cp(h, 4, g1w[...], g1b[...]))
    h = jnp.dot(w2[...], h, preferred_element_type=jnp.float32) + b2[...]
    h = _leaky_relu(_group_norm_cp(h, 4, g2w[...], g2b[...]))
    # final 16 -> 1 projection as VPU broadcast-multiply + sublane reduce (no M=1 MXU op)
    h = jnp.sum(w3[...] * h, axis=0, keepdims=True) + b3[...]        # (1, P)
    pp = ph - h                                                      # LatentCodedMLP: phases - after_relu
    a = amp_ref[...]
    re_ref[0] = a * jnp.cos(pp)                                      # polar_to_rect
    im_ref[0] = a * jnp.sin(pp)


# ---------------------------------------------------------------------------- Kernel 2: frequency-domain complex multiply (tiled, H reused over batch)
def _cmul_kernel(ur_ref, ui_ref, hr_ref, hi_ref, or_ref, oi_ref):
    ur, ui = ur_ref[0], ui_ref[0]
    hr, hi = hr_ref[...], hi_ref[...]
    or_ref[0] = ur * hr - ui * hi
    oi_ref[0] = ur * hi + ui * hr


@functools.lru_cache(maxsize=16)
def _asm_transfer_function(H, W, dy, dx, wavelength, z):
    # Batch/phase invariant: computed once per (geometry, wavelength, distance).
    H2, W2 = 2 * H, 2 * W
    ylen, xlen = dy * H2, dx * W2
    fy = np.linspace(-1 / (2 * dy) + 0.5 / (2 * ylen), 1 / (2 * dy) - 0.5 / (2 * ylen), H2)
    fx = np.linspace(-1 / (2 * dx) + 0.5 / (2 * xlen), 1 / (2 * dx) - 0.5 / (2 * xlen), W2)
    FY, FX = np.meshgrid(fy, fx, indexing="ij")
    h_exp = 2 * np.pi * np.sqrt(np.maximum(1 / wavelength ** 2 - (FX ** 2 + FY ** 2), 0.0))
    fy_max = 1 / np.sqrt((2 * z * (1 / ylen)) ** 2 + 1) / wavelength      # Matsushima 2009
    fx_max = 1 / np.sqrt((2 * z * (1 / xlen)) ** 2 + 1) / wavelength
    h_filt = ((np.abs(FX) < fx_max) & (np.abs(FY) < fy_max)).astype(np.float32)
    h_re = np.fft.ifftshift(h_filt * np.cos(h_exp * z)).astype(np.float32)
    h_im = np.fft.ifftshift(h_filt * np.sin(h_exp * z)).astype(np.float32)
    return jnp.asarray(h_re), jnp.asarray(h_im)


def propagation_asm(u_re, u_im, feature_size, wavelength, z, vmem_budget):
    """Band-limited ASM (linear_conv=True): pad 2x, FFT, multiply by cached H, IFFT, crop.
    TODO(synk): FFT has no Pallas equivalent; jnp.fft is XLA glue -- the per-pixel complex
    transfer-function multiply is the Pallas kernel."""
    B, H, W = u_re.shape
    H2, W2 = 2 * H, 2 * W
    py, px = (H2 - H) // 2, (W2 - W) // 2
    u_pad = jnp.pad(u_re + 1j * u_im, ((0, 0), (py, H2 - H - py), (px, W2 - W - px)))

    h_re, h_im = _asm_transfer_function(H, W, float(feature_size[0]), float(feature_size[1]),
                                        float(wavelength), float(z))

    U1 = jnp.fft.fft2(jnp.fft.ifftshift(u_pad, axes=(-2, -1)), norm="ortho")
    u1r = jnp.real(U1).astype(jnp.float32)
    u1i = jnp.imag(U1).astype(jnp.float32)

    # Lane-dense flat layout (rows, 128) when possible; fallback keeps (H2, W2).
    P2 = H2 * W2
    if P2 % 128 == 0:
        NR, LW = P2 // 128, 128
    else:
        NR, LW = H2, W2         # TODO(synk): lane-sparse stores when W2 < 128 in this fallback
    u1r = u1r.reshape(B, NR, LW)
    u1i = u1i.reshape(B, NR, LW)
    hr = h_re.reshape(NR, LW)
    hi = h_im.reshape(NR, LW)

    # Tile rows so 6 planes (4 in + 2 out) x 2 pipeline buffers fit comfortably in budget.
    bytes_per_row = 6 * 2 * LW * 4
    row_target = max(8, vmem_budget // (3 * bytes_per_row))
    TS = _pick_tile(NR, row_target)
    nT = NR // TS

    u2r, u2i = pl.pallas_call(
        _cmul_kernel,
        grid=(nT, B),          # rows outer, batch inner -> H tiles reused across the batch
        in_specs=[pl.BlockSpec((1, TS, LW), lambda t, b: (b, t, 0)),
                  pl.BlockSpec((1, TS, LW), lambda t, b: (b, t, 0)),
                  pl.BlockSpec((TS, LW), lambda t, b: (t, 0)),
                  pl.BlockSpec((TS, LW), lambda t, b: (t, 0))],
        out_specs=[pl.BlockSpec((1, TS, LW), lambda t, b: (b, t, 0))] * 2,
        out_shape=[jax.ShapeDtypeStruct((B, NR, LW), jnp.float32)] * 2,
        compiler_params=pltpu.CompilerParams(
            dimension_semantics=("parallel", "parallel"),
            vmem_limit_bytes=vmem_budget),
    )(u1r, u1i, hr, hi)

    u2 = (u2r + 1j * u2i).reshape(B, H2, W2)
    u_out = jnp.fft.fftshift(jnp.fft.ifft2(u2, norm="ortho"), axes=(-2, -1))
    u_out = u_out[:, py:py + H, px:px + W]
    return jnp.real(u_out).astype(jnp.float32), jnp.imag(u_out).astype(jnp.float32)


# ---------------------------------------------------------------------------- Kernel 3: ContentDependentField + rect + target/prop add (fused)
def _make_cdf_finalize_kernel(H, W):
    P = H * W
    taps = [(dy, dx) for dy in (-1, 0, 1) for dx in (-1, 0, 1)]
    shifts = [(-(dy * W + dx)) % P for dy, dx in taps]
    gn_groups = (2, 2, 2, 4)

    def kernel(ph_ref, mask_ref,
               w0, b0, wm, bm, w4, b4, gw, gb,
               pr_ref, pi_ref, tr_ref, ti_ref,
               or_ref, oi_ref):
        # 3x3 SAME conv on flattened pixels: per-tap roll (XLU) + boundary mask + small dot.
        # TODO(synk): Conv2dSame definition not provided; zero-padded SAME conv assumed.
        # Hoisted reads -- masks and weights are reused by all 5 conv layers.
        m = [mask_ref[t:t + 1, :] for t in range(9)]                 # each (1, P)
        w0v, b0v = w0[...], b0[...]                                  # (9,8,1), (8,1)
        wmv, bmv = wm[...], bm[...]                                  # (3,9,8,8), (3,8,1)
        w4v, b4v = w4[...], b4[...]                                  # (9,2,8), (2,1)
        gwv, gbv = gw[...], gb[...]                                  # (4,8,1)

        ph = ph_ref[0]                                               # (1, P)

        # ---- layer 0: 1 -> 8, per-tap broadcast-FMA (C_in = 1, no MXU) ----
        h = w0v[4] * ph + b0v                                        # center tap, mask == 1
        for t in range(9):
            if t == 4:
                continue
            sh = pltpu.roll(ph, shift=shifts[t], axis=1)
            h = h + w0v[t] * (sh * m[t])                             # (8, P)

        # ---- layers 1..3: GN -> LeakyReLU -> 3x3 conv (8 -> 8), per-tap dot ----
        for i in range(3):
            h = _leaky_relu(_group_norm_cp(h, gn_groups[i], gwv[i], gbv[i]))
            acc = jnp.dot(wmv[i, 4], h, preferred_element_type=jnp.float32) + bmv[i]
            for t in range(9):
                if t == 4:
                    continue
                sh = pltpu.roll(h, shift=shifts[t], axis=1)
                acc = acc + jnp.dot(wmv[i, t], sh * m[t],
                                    preferred_element_type=jnp.float32)
            h = acc                                                  # (8, P)

        # ---- layer 4: GN -> LeakyReLU -> 3x3 conv (8 -> 2); mask AFTER the dot
        #      (mask commutes with the channel dot; 2 masked planes instead of 8). ----
        h = _leaky_relu(_group_norm_cp(h, gn_groups[3], gwv[3], gbv[3]))
        acc = jnp.dot(w4v[4], h, preferred_element_type=jnp.float32) + b4v
        for t in range(9):
            if t == 4:
                continue
            sh = pltpu.roll(h, shift=shifts[t], axis=1)
            acc = acc + m[t] * jnp.dot(w4v[t], sh, preferred_element_type=jnp.float32)
        h = acc                                                      # (2, P): [amp, phase]

        # cdf[...,0]=amp, cdf[...,1]=phase -> rect, then add target + propagated field.
        cdf_re = h[0:1] * jnp.cos(h[1:2])
        cdf_im = h[0:1] * jnp.sin(h[1:2])
        # rect->polar->rect of the sum is the exact identity for blur=None: just add.
        or_ref[0] = pr_ref[0] + tr_ref[0] + cdf_re
        oi_ref[0] = pi_ref[0] + ti_ref[0] + cdf_im

    return kernel


# ---------------------------------------------------------------------------- full forward
def model_propagate_distanced(phases, distance, params):
    """phases: (B,1,H,W) float32 (NCHW), distance: python float. Returns (B,1,H,W) complex64."""
    B, _, H, W = phases.shape
    P = H * W
    ph_flat = phases.reshape(B, 1, P).astype(jnp.float32)

    lat = params["latent_code"].reshape(2, P)                   # latent code, batch-invariant
    amp_map = _source_amp_map(H, W, params["src"]).reshape(1, P)
    budget = _vmem_budget_bytes()

    # 1) LatentCodedMLP + SourceAmplitude + polar_to_rect (one fused kernel, grid over batch)
    # TODO(synk): whole-image GroupNorm forces full spatial residency per grid step; spatial
    # tiling with halos + two-pass GN would be needed for production hologram resolutions
    # (and to feed the second v7x TensorCore when B is small).
    lcm = params["lcm"]
    pc_re, pc_im = pl.pallas_call(
        _lcm_src_polar_kernel,
        grid=(B,),
        in_specs=[pl.BlockSpec((1, 1, P), lambda b: (b, 0, 0)),
                  _const_spec(lat.shape),
                  _const_spec(amp_map.shape)] + [_const_spec(p.shape) for p in lcm],
        out_specs=[pl.BlockSpec((1, 1, P), lambda b: (b, 0, 0))] * 2,
        out_shape=[jax.ShapeDtypeStruct((B, 1, P), jnp.float32)] * 2,
        compiler_params=pltpu.CompilerParams(dimension_semantics=("parallel",),
                                             vmem_limit_bytes=budget),
    )(ph_flat, lat, amp_map, *lcm)

    # 2) Zernike corrections: num_coeffs=0 -> none; coeffs_fourier init 0.0 -> identity on H.
    # TODO(synk): compute_zernike_basis/combine_zernike_basis not re-implemented; with
    # init_coeffs=0.0 their contribution is exactly exp(i*0)=1.

    # 3) ASM propagation (eval branch, learn_dist=False)
    out_re, out_im = propagation_asm(pc_re.reshape(B, H, W), pc_im.reshape(B, H, W),
                                     params["feature_size"], params["wavelength"],
                                     float(distance), budget)

    # 4) ContentDependentField + cdf rect + target field + propagated field (one fused kernel)
    t_re = (params["target_amp"] * jnp.cos(params["target_phase"])).reshape(1, 1, P).astype(jnp.float32)
    t_im = (params["target_amp"] * jnp.sin(params["target_phase"])).reshape(1, 1, P).astype(jnp.float32)
    masks = _conv_tap_masks(H, W)
    cdf = params["cdf"]
    kernel3 = _make_cdf_finalize_kernel(H, W)

    fr, fi = pl.pallas_call(
        kernel3,
        grid=(B,),
        in_specs=[pl.BlockSpec((1, 1, P), lambda b: (b, 0, 0)),
                  _const_spec(masks.shape)]
                 + [_const_spec(p.shape) for p in cdf]
                 + [pl.BlockSpec((1, 1, P), lambda b: (b, 0, 0)),
                    pl.BlockSpec((1, 1, P), lambda b: (b, 0, 0)),
                    _const_spec((1, 1, P)),
                    _const_spec((1, 1, P))],
        out_specs=[pl.BlockSpec((1, 1, P), lambda b: (b, 0, 0))] * 2,
        out_shape=[jax.ShapeDtypeStruct((B, 1, P), jnp.float32)] * 2,
        compiler_params=pltpu.CompilerParams(dimension_semantics=("parallel",),
                                             vmem_limit_bytes=budget),
    )(ph_flat, masks, *cdf,
      out_re.reshape(B, 1, P), out_im.reshape(B, 1, P), t_re, t_im)

    return (fr + 1j * fi).reshape(B, 1, H, W)


# ---------------------------------------------------------------------------- deterministic parameter init
def init_params(key, image_res=(16, 16), num_feats_cdp=8):
    H, W = image_res
    keys = jax.random.split(key, 8)

    # LatentCodedMLP (num_layers=3, num_features=16, num_latent_codes=[2,0,0]).
    # Weights stored (C_out, C_in); the 3-input first layer is split into a phase column
    # and a latent block; the last layer is stored as a (16,1) column for the VPU reduce.
    w1 = 0.05 * jax.random.normal(keys[0], (16, 3), jnp.float32)
    w1_ph, w1_lat = w1[:, 0:1], w1[:, 1:3]            # torch.cat((phase, latent), dim=1) order
    b1 = 0.02 * jax.random.normal(keys[1], (16, 1), jnp.float32)
    w2 = 0.05 * jax.random.normal(keys[2], (16, 16), jnp.float32)
    b2 = 0.02 * jax.random.normal(keys[3], (16, 1), jnp.float32)
    w3 = 0.05 * jax.random.normal(keys[4], (16, 1), jnp.float32)
    b3 = 0.02 * jax.random.normal(keys[5], (1, 1), jnp.float32)
    ones16 = jnp.ones((16, 1), jnp.float32)
    zeros16 = jnp.zeros((16, 1), jnp.float32)
    lcm = (w1_ph, w1_lat, b1, ones16, zeros16, w2, b2, ones16, zeros16, w3, b3)

    latent_code = jnp.zeros((1, 2, H, W), jnp.float32)          # nn.Parameter(torch.zeros(1,2,H,W))

    # SourceAmplitude: sigmas=(1300,1500,1700), x_s=y_s=0, amps=ones(3)/3*0.9, dc=0
    src = (jnp.array([1300.0, 1500.0, 1700.0], jnp.float32),
           jnp.zeros((3,), jnp.float32),
           jnp.zeros((3,), jnp.float32),
           jnp.ones((3,), jnp.float32) / 3.0 * 0.9,
           jnp.zeros((1,), jnp.float32))

    target_amp = 0.07 * jnp.ones((1, H, W), jnp.float32)
    target_phase = jnp.zeros((1, H, W), jnp.float32)

    # ContentDependentField: 3x3 convs 1->8, (8->8)x3, 8->2; GN groups (2,2,2,4).
    # Weight layout: (9, C_out, C_in), tap index t = (dy+1)*3 + (dx+1) -- matches the
    # kernel's per-tap roll ordering.
    C = num_feats_cdp
    cins, couts = [1, C, C, C, C], [C, C, C, C, 2]
    wkeys = jax.random.split(keys[6], 5)
    bkeys = jax.random.split(keys[7], 5)
    ws, bs = [], []
    for l in range(5):
        scale = 1.0 / np.sqrt(9.0 * cins[l])
        wl = scale * jax.random.normal(wkeys[l], (couts[l], cins[l], 3, 3), jnp.float32)
        ws.append(jnp.transpose(wl, (2, 3, 0, 1)).reshape(9, couts[l], cins[l]))
        bs.append(0.02 * jax.random.normal(bkeys[l], (couts[l], 1), jnp.float32))
    w0, b0 = ws[0], bs[0]                    # (9, 8, 1), (8, 1)
    wm = jnp.stack(ws[1:4], 0)               # (3, 9, 8, 8)
    bm = jnp.stack(bs[1:4], 0)               # (3, 8, 1)
    w4, b4 = ws[4], bs[4]                    # (9, 2, 8), (2, 1)
    gn_w = jnp.ones((4, C, 1), jnp.float32)
    gn_b = jnp.zeros((4, C, 1), jnp.float32)
    cdf = (w0, b0, wm, bm, w4, b4, gn_w, gn_b)

    return dict(lcm=lcm, latent_code=latent_code, src=src,
                target_amp=target_amp, target_phase=target_phase, cdf=cdf,
                wavelength=5.2e-7, feature_size=(6.4e-6, 6.4e-6))


if __name__ == "__main__":
    key = jax.random.PRNGKey(0)
    kx, kp = jax.random.split(key)
    B, H, W = 2, 16, 16
    phases = jax.random.uniform(kx, (B, 1, H, W), jnp.float32, -np.pi, np.pi)
    distance = 1e-3                                         # x = (slm_phase, distance)
    params = init_params(kp, image_res=(H, W))

    out = model_propagate_distanced(phases, distance, params)
    out = jax.block_until_ready(out)

    assert out.shape == (B, 1, H, W) and jnp.iscomplexobj(out)
    assert bool(jnp.all(jnp.isfinite(jnp.real(out)) & jnp.isfinite(jnp.imag(out))))
    print("KERNEL_OK")
</pallas_src>

<mosaic_0001>
module attributes {stable_mosaic.version = 11 : i64} {
  func.func @_lcm_src_polar_kernel(%arg0: i32, %arg1: memref<1x1x256xf32, #tpu.memory_space<vmem>>, %arg2: memref<2x256xf32, #tpu.memory_space<vmem>>, %arg3: memref<1x256xf32, #tpu.memory_space<vmem>>, %arg4: memref<16x1xf32, #tpu.memory_space<vmem>>, %arg5: memref<16x2xf32, #tpu.memory_space<vmem>>, %arg6: memref<16x1xf32, #tpu.memory_space<vmem>>, %arg7: memref<16x1xf32, #tpu.memory_space<vmem>>, %arg8: memref<16x1xf32, #tpu.memory_space<vmem>>, %arg9: memref<16x16xf32, #tpu.memory_space<vmem>>, %arg10: memref<16x1xf32, #tpu.memory_space<vmem>>, %arg11: memref<16x1xf32, #tpu.memory_space<vmem>>, %arg12: memref<16x1xf32, #tpu.memory_space<vmem>>, %arg13: memref<16x1xf32, #tpu.memory_space<vmem>>, %arg14: memref<1x1xf32, #tpu.memory_space<vmem>>, %arg15: memref<1x1x256xf32, #tpu.memory_space<vmem>>, %arg16: memref<1x1x256xf32, #tpu.memory_space<vmem>>) attributes {dimension_semantics = [#tpu.dimension_semantics<parallel>], iteration_bounds = array<i64: 2>, scalar_prefetch = 0 : i64, scratch_operands = 0 : i64, tpu.core_type = #tpu.core_type<tc>, window_params = [{transform_indices = @transform_0, window_bounds = array<i64: 1, 1, 256>}, {pipeline_mode = #tpu.pipeline_mode<synchronous>, transform_indices = @transform_1, window_bounds = array<i64: 2, 256>}, {pipeline_mode = #tpu.pipeline_mode<synchronous>, transform_indices = @transform_2, window_bounds = array<i64: 1, 256>}, {pipeline_mode = #tpu.pipeline_mode<synchronous>, transform_indices = @transform_3, window_bounds = array<i64: 16, 1>}, {pipeline_mode = #tpu.pipeline_mode<synchronous>, transform_indices = @transform_4, window_bounds = array<i64: 16, 2>}, {pipeline_mode = #tpu.pipeline_mode<synchronous>, transform_indices = @transform_5, window_bounds = array<i64: 16, 1>}, {pipeline_mode = #tpu.pipeline_mode<synchronous>, transform_indices = @transform_6, window_bounds = array<i64: 16, 1>}, {pipeline_mode = #tpu.pipeline_mode<synchronous>, transform_indices = @transform_7, window_bounds = array<i64: 16, 1>}, {pipeline_mode = #tpu.pipeline_mode<synchronous>, transform_indices = @transform_8, window_bounds = array<i64: 16, 16>}, {pipeline_mode = #tpu.pipeline_mode<synchronous>, transform_indices = @transform_9, window_bounds = array<i64: 16, 1>}, {pipeline_mode = #tpu.pipeline_mode<synchronous>, transform_indices = @transform_10, window_bounds = array<i64: 16, 1>}, {pipeline_mode = #tpu.pipeline_mode<synchronous>, transform_indices = @transform_11, window_bounds = array<i64: 16, 1>}, {pipeline_mode = #tpu.pipeline_mode<synchronous>, transform_indices = @transform_12, window_bounds = array<i64: 16, 1>}, {pipeline_mode = #tpu.pipeline_mode<synchronous>, transform_indices = @transform_13, window_bounds = array<i64: 1, 1>}, {transform_indices = @transform_14, window_bounds = array<i64: 1, 1, 256>}, {transform_indices = @transform_15, window_bounds = array<i64: 1, 1, 256>}]} {
    %c0 = arith.constant 0 : index
    %c0_0 = arith.constant 0 : index
    %c0_1 = arith.constant 0 : index
    %0 = vector.load %arg1[%c0, %c0_0, %c0_1] : memref<1x1x256xf32, #tpu.memory_space<vmem>>, vector<1x1x256xf32>
    %1 = vector.shape_cast %0 : vector<1x1x256xf32> to vector<1x256xf32>
    %c0_2 = arith.constant 0 : index
    %c0_3 = arith.constant 0 : index
    %2 = vector.load %arg2[%c0_2, %c0_3] : memref<2x256xf32, #tpu.memory_space<vmem>>, vector<2x256xf32>
    %c0_4 = arith.constant 0 : index
    %c0_5 = arith.constant 0 : index
    %3 = vector.load %arg5[%c0_4, %c0_5] : memref<16x2xf32, #tpu.memory_space<vmem>>, vector<16x2xf32>
    %c0_6 = arith.constant 0 : index
    %c0_7 = arith.constant 0 : index
    %4 = vector.load %arg4[%c0_6, %c0_7] : memref<16x1xf32, #tpu.memory_space<vmem>>, vector<16x1xf32>
    %5 = vector.broadcast %4 : vector<16x1xf32> to vector<16x256xf32>
    %6 = vector.broadcast %1 : vector<1x256xf32> to vector<16x256xf32>
    %7 = arith.mulf %5, %6 : vector<16x256xf32>
    %8 = vector.extract_strided_slice %3 {offsets = [0, 0], sizes = [16, 1], strides = [1, 1]} : vector<16x2xf32> to vector<16x1xf32>
    %9 = vector.extract_strided_slice %2 {offsets = [0, 0], sizes = [1, 256], strides = [1, 1]} : vector<2x256xf32> to vector<1x256xf32>
    %10 = vector.broadcast %8 : vector<16x1xf32> to vector<16x256xf32>
    %11 = vector.broadcast %9 : vector<1x256xf32> to vector<16x256xf32>
    %12 = arith.mulf %10, %11 : vector<16x256xf32>
    %13 = arith.addf %7, %12 : vector<16x256xf32>
    %14 = vector.extract_strided_slice %3 {offsets = [0, 1], sizes = [16, 1], strides = [1, 1]} : vector<16x2xf32> to vector<16x1xf32>
    %15 = vector.extract_strided_slice %2 {offsets = [1, 0], sizes = [1, 256], strides = [1, 1]} : vector<2x256xf32> to vector<1x256xf32>
    %16 = vector.broadcast %14 : vector<16x1xf32> to vector<16x256xf32>
    %17 = vector.broadcast %15 : vector<1x256xf32> to vector<16x256xf32>
    %18 = arith.mulf %16, %17 : vector<16x256xf32>
    %19 = arith.addf %13, %18 : vector<16x256xf32>
    %c0_8 = arith.constant 0 : index
    %c0_9 = arith.constant 0 : index
    %20 = vector.load %arg6[%c0_8, %c0_9] : memref<16x1xf32, #tpu.memory_space<vmem>>, vector<16x1xf32>
    %21 = vector.broadcast %20 : vector<16x1xf32> to vector<16x256xf32>
    %22 = arith.addf %19, %21 : vector<16x256xf32>
    %c0_10 = arith.constant 0 : index
    %c0_11 = arith.constant 0 : index
    %23 = vector.load %arg7[%c0_10, %c0_11] : memref<16x1xf32, #tpu.memory_space<vmem>>, vector<16x1xf32>
    %c0_12 = arith.constant 0 : index
    %c0_13 = arith.constant 0 : index
    %24 = vector.load %arg8[%c0_12, %c0_13] : memref<16x1xf32, #tpu.memory_space<vmem>>, vector<16x1xf32>
    %cst = arith.constant dense<0.000000e+00> : vector<16xf32>
    %25 = vector.multi_reduction <add>, %22, %cst [1] : vector<16x256xf32> to vector<16xf32>
    %26 = vector.shape_cast %25 : vector<16xf32> to vector<16x1xf32>
    %27 = arith.mulf %22, %22 : vector<16x256xf32>
    %cst_14 = arith.constant dense<0.000000e+00> : vector<16xf32>
    %28 = vector.multi_reduction <add>, %27, %cst_14 [1] : vector<16x256xf32> to vector<16xf32>
    %29 = vector.shape_cast %28 : vector<16xf32> to vector<16x1xf32>
    %30 = vector.extract_strided_slice %26 {offsets = [0, 0], sizes = [4, 1], strides = [1, 1]} : vector<16x1xf32> to vector<4x1xf32>
    %31 = vector.shape_cast %30 : vector<4x1xf32> to vector<1x4x1xf32>
    %cst_15 = arith.constant dense<0.000000e+00> : vector<1xf32>
    %32 = vector.multi_reduction <add>, %31, %cst_15 [1, 2] : vector<1x4x1xf32> to vector<1xf32>
    %33 = vector.shape_cast %32 : vector<1xf32> to vector<1x1x1xf32>
    %34 = vector.extract %33[0, 0, 0] : f32 from vector<1x1x1xf32>
    %cst_16 = arith.constant 1.024000e+03 : f32
    %35 = arith.divf %34, %cst_16 : f32
    %36 = vector.extract_strided_slice %29 {offsets = [0, 0], sizes = [4, 1], strides = [1, 1]} : vector<16x1xf32> to vector<4x1xf32>
    %37 = vector.shape_cast %36 : vector<4x1xf32> to vector<1x4x1xf32>
    %cst_17 = arith.constant dense<0.000000e+00> : vector<1xf32>
    %38 = vector.multi_reduction <add>, %37, %cst_17 [1, 2] : vector<1x4x1xf32> to vector<1xf32>
    %39 = vector.shape_cast %38 : vector<1xf32> to vector<1x1x1xf32>
    %40 = vector.extract %39[0, 0, 0] : f32 from vector<1x1x1xf32>
    %cst_18 = arith.constant 1.024000e+03 : f32
    %41 = arith.divf %40, %cst_18 : f32
    %42 = arith.mulf %35, %35 : f32
    %43 = arith.subf %41, %42 : f32
    %cst_19 = arith.constant 9.99999974E-6 : f32
    %44 = arith.addf %43, %cst_19 : f32
    %45 = math.rsqrt %44 : f32
    %46 = vector.extract_strided_slice %23 {offsets = [0, 0], sizes = [4, 1], strides = [1, 1]} : vector<16x1xf32> to vector<4x1xf32>
    %47 = vector.broadcast %45 : f32 to vector<4x1xf32>
    %48 = arith.mulf %46, %47 : vector<4x1xf32>
    %49 = vector.extract_strided_slice %24 {offsets = [0, 0], sizes = [4, 1], strides = [1, 1]} : vector<16x1xf32> to vector<4x1xf32>
    %50 = vector.broadcast %35 : f32 to vector<4x1xf32>
    %51 = arith.mulf %50, %48 : vector<4x1xf32>
    %52 = arith.subf %49, %51 : vector<4x1xf32>
    %53 = vector.extract_strided_slice %26 {offsets = [4, 0], sizes = [4, 1], strides = [1, 1]} : vector<16x1xf32> to vector<4x1xf32>
    %54 = vector.shape_cast %53 : vector<4x1xf32> to vector<1x4x1xf32>
    %cst_20 = arith.constant dense<0.000000e+00> : vector<1xf32>
    %55 = vector.multi_reduction <add>, %54, %cst_20 [1, 2] : vector<1x4x1xf32> to vector<1xf32>
    %56 = vector.shape_cast %55 : vector<1xf32> to vector<1x1x1xf32>
    %57 = vector.extract %56[0, 0, 0] : f32 from vector<1x1x1xf32>
    %cst_21 = arith.constant 1.024000e+03 : f32
    %58 = arith.divf %57, %cst_21 : f32
    %59 = vector.extract_strided_slice %29 {offsets = [4, 0], sizes = [4, 1], strides = [1, 1]} : vector<16x1xf32> to vector<4x1xf32>
    %60 = vector.shape_cast %59 : vector<4x1xf32> to vector<1x4x1xf32>
    %cst_22 = arith.constant dense<0.000000e+00> : vector<1xf32>
    %61 = vector.multi_reduction <add>, %60, %cst_22 [1, 2] : vector<1x4x1xf32> to vector<1xf32>
    %62 = vector.shape_cast %61 : vector<1xf32> to vector<1x1x1xf32>
    %63 = vector.extract %62[0, 0, 0] : f32 from vector<1x1x1xf32>
    %cst_23 = arith.constant 1.024000e+03 : f32
    %64 = arith.divf %63, %cst_23 : f32
    %65 = arith.mulf %58, %58 : f32
    %66 = arith.subf %64, %65 : f32
    %cst_24 = arith.constant 9.99999974E-6 : f32
    %67 = arith.addf %66, %cst_24 : f32
    %68 = math.rsqrt %67 : f32
    %69 = vector.extract_strided_slice %23 {offsets = [4, 0], sizes = [4, 1], strides = [1, 1]} : vector<16x1xf32> to vector<4x1xf32>
    %70 = vector.broadcast %68 : f32 to vector<4x1xf32>
    %71 = arith.mulf %69, %70 : vector<4x1xf32>
    %72 = vector.extract_strided_slice %24 {offsets = [4, 0], sizes = [4, 1], strides = [1, 1]} : vector<16x1xf32> to vector<4x1xf32>
    %73 = vector.broadcast %58 : f32 to vector<4x1xf32>
    %74 = arith.mulf %73, %71 : vector<4x1xf32>
    %75 = arith.subf %72, %74 : vector<4x1xf32>
    %76 = vector.extract_strided_slice %26 {offsets = [8, 0], sizes = [4, 1], strides = [1, 1]} : vector<16x1xf32> to vector<4x1xf32>
    %77 = vector.shape_cast %76 : vector<4x1xf32> to vector<1x4x1xf32>
    %cst_25 = arith.constant dense<0.000000e+00> : vector<1xf32>
    %78 = vector.multi_reduction <add>, %77, %cst_25 [1, 2] : vector<1x4x1xf32> to vector<1xf32>
    %79 = vector.shape_cast %78 : vector<1xf32> to vector<1x1x1xf32>
    %80 = vector.extract %79[0, 0, 0] : f32 from vector<1x1x1xf32>
    %cst_26 = arith.constant 1.024000e+03 : f32
    %81 = arith.divf %80, %cst_26 : f32
    %82 = vector.extract_strided_slice %29 {offsets = [8, 0], sizes = [4, 1], strides = [1, 1]} : vector<16x1xf32> to vector<4x1xf32>
    %83 = vector.shape_cast %82 : vector<4x1xf32> to vector<1x4x1xf32>
    %cst_27 = arith.constant dense<0.000000e+00> : vector<1xf32>
    %84 = vector.multi_reduction <add>, %83, %cst_27 [1, 2] : vector<1x4x1xf32> to vector<1xf32>
    %85 = vector.shape_cast %84 : vector<1xf32> to vector<1x1x1xf32>
    %86 = vector.extract %85[0, 0, 0] : f32 from vector<1x1x1xf32>
    %cst_28 = arith.constant 1.024000e+03 : f32
    %87 = arith.divf %86, %cst_28 : f32
    %88 = arith.mulf %81, %81 : f32
    %89 = arith.subf %87, %88 : f32
    %cst_29 = arith.constant 9.99999974E-6 : f32
    %90 = arith.addf %89, %cst_29 : f32
    %91 = math.rsqrt %90 : f32
    %92 = vector.extract_strided_slice %23 {offsets = [8, 0], sizes = [4, 1], strides = [1, 1]} : vector<16x1xf32> to vector<4x1xf32>
    %93 = vector.broadcast %91 : f32 to vector<4x1xf32>
    %94 = arith.mulf %92, %93 : vector<4x1xf32>
    %95 = vector.extract_strided_slice %24 {offsets = [8, 0], sizes = [4, 1], strides = [1, 1]} : vector<16x1xf32> to vector<4x1xf32>
    %96 = vector.broadcast %81 : f32 to vector<4x1xf32>
    %97 = arith.mulf %96, %94 : vector<4x1xf32>
    %98 = arith.subf %95, %97 : vector<4x1xf32>
    %99 = vector.extract_strided_slice %26 {offsets = [12, 0], sizes = [4, 1], strides = [1, 1]} : vector<16x1xf32> to vector<4x1xf32>
    %100 = vector.shape_cast %99 : vector<4x1xf32> to vector<1x4x1xf32>
    %cst_30 = arith.constant dense<0.000000e+00> : vector<1xf32>
    %101 = vector.multi_reduction <add>, %100, %cst_30 [1, 2] : vector<1x4x1xf32> to vector<1xf32>
    %102 = vector.shape_cast %101 : vector<1xf32> to vector<1x1x1xf32>
    %103 = vector.extract %102[0, 0, 0] : f32 from vector<1x1x1xf32>
    %cst_31 = arith.constant 1.024000e+03 : f32
    %104 = arith.divf %103, %cst_31 : f32
    %105 = vector.extract_strided_slice %29 {offsets = [12, 0], sizes = [4, 1], strides = [1, 1]} : vector<16x1xf32> to vector<4x1xf32>
    %106 = vector.shape_cast %105 : vector<4x1xf32> to vector<1x4x1xf32>
    %cst_32 = arith.constant dense<0.000000e+00> : vector<1xf32>
    %107 = vector.multi_reduction <add>, %106, %cst_32 [1, 2] : vector<1x4x1xf32> to vector<1xf32>
    %108 = vector.shape_cast %107 : vector<1xf32> to vector<1x1x1xf32>
    %109 = vector.extract %108[0, 0, 0] : f32 from vector<1x1x1xf32>
    %cst_33 = arith.constant 1.024000e+03 : f32
    %110 = arith.divf %109, %cst_33 : f32
    %111 = arith.mulf %104, %104 : f32
    %112 = arith.subf %110, %111 : f32
    %cst_34 = arith.constant 9.99999974E-6 : f32
    %113 = arith.addf %112, %cst_34 : f32
    %114 = math.rsqrt %113 : f32
    %115 = vector.extract_strided_slice %23 {offsets = [12, 0], sizes = [4, 1], strides = [1, 1]} : vector<16x1xf32> to vector<4x1xf32>
    %116 = vector.broadcast %114 : f32 to vector<4x1xf32>
    %117 = arith.mulf %115, %116 : vector<4x1xf32>
    %118 = vector.extract_strided_slice %24 {offsets = [12, 0], sizes = [4, 1], strides = [1, 1]} : vector<16x1xf32> to vector<4x1xf32>
    %119 = vector.broadcast %104 : f32 to vector<4x1xf32>
    %120 = arith.mulf %119, %117 : vector<4x1xf32>
    %121 = arith.subf %118, %120 : vector<4x1xf32>
    %122 = tpu.concatenate %48, %71, %94, %117 in 0 : vector<4x1xf32>, vector<4x1xf32>, vector<4x1xf32>, vector<4x1xf32> -> vector<16x1xf32>
    %123 = tpu.concatenate %52, %75, %98, %121 in 0 : vector<4x1xf32>, vector<4x1xf32>, vector<4x1xf32>, vector<4x1xf32> -> vector<16x1xf32>
    %124 = vector.broadcast %122 : vector<16x1xf32> to vector<16x256xf32>
    %125 = arith.mulf %22, %124 : vector<16x256xf32>
    %126 = vector.broadcast %123 : vector<16x1xf32> to vector<16x256xf32>
    %127 = arith.addf %125, %126 : vector<16x256xf32>
    %cst_35 = arith.constant 0.000000e+00 : f32
    %128 = vector.broadcast %cst_35 : f32 to vector<16x256xf32>
    %129 = arith.cmpf oge, %127, %128 : vector<16x256xf32>
    %cst_36 = arith.constant 2.000000e-01 : f32
    %130 = vector.broadcast %cst_36 : f32 to vector<16x256xf32>
    %131 = arith.mulf %130, %127 : vector<16x256xf32>
    %132 = arith.select %129, %127, %131 : vector<16x256xi1>, vector<16x256xf32>
    %c0_37 = arith.constant 0 : index
    %c0_38 = arith.constant 0 : index
    %133 = vector.load %arg9[%c0_37, %c0_38] : memref<16x16xf32, #tpu.memory_space<vmem>>, vector<16x16xf32>
    %cst_39 = arith.constant dense<0.000000e+00> : vector<16x256xf32>
    %134 = tpu.matmul %133, %132, %cst_39 {dimension_numbers = #tpu.dot_dimension_numbers<[1], [0], [0], [1], [0, 0, 1, 1], [], []>} : vector<16x16xf32>, vector<16x256xf32>, vector<16x256xf32> -> vector<16x256xf32>
    %c0_40 = arith.constant 0 : index
    %c0_41 = arith.constant 0 : index
    %135 = vector.load %arg10[%c0_40, %c0_41] : memref<16x1xf32, #tpu.memory_space<vmem>>, vector<16x1xf32>
    %136 = vector.broadcast %135 : vector<16x1xf32> to vector<16x256xf32>
    %137 = arith.addf %134, %136 : vector<16x256xf32>
    %c0_42 = arith.constant 0 : index
    %c0_43 = arith.constant 0 : index
    %138 = vector.load %arg11[%c0_42, %c0_43] : memref<16x1xf32, #tpu.memory_space<vmem>>, vector<16x1xf32>
    %c0_44 = arith.constant 0 : index
    %c0_45 = arith.constant 0 : index
    %139 = vector.load %arg12[%c0_44, %c0_45] : memref<16x1xf32, #tpu.memory_space<vmem>>, vector<16x1xf32>
    %cst_46 = arith.constant dense<0.000000e+00> : vector<16xf32>
    %140 = vector.multi_reduction <add>, %137, %cst_46 [1] : vector<16x256xf32> to vector<16xf32>
    %141 = vector.shape_cast %140 : vector<16xf32> to vector<16x1xf32>
    %142 = arith.mulf %137, %137 : vector<16x256xf32>
    %cst_47 = arith.constant dense<0.000000e+00> : vector<16xf32>
    %143 = vector.multi_reduction <add>, %142, %cst_47 [1] : vector<16x256xf32> to vector<16xf32>
    %144 = vector.shape_cast %143 : vector<16xf32> to vector<16x1xf32>
    %145 = vector.extract_strided_slice %141 {offsets = [0, 0], sizes = [4, 1], strides = [1, 1]} : vector<16x1xf32> to vector<4x1xf32>
    %146 = vector.shape_cast %145 : vector<4x1xf32> to vector<1x4x1xf32>
    %cst_48 = arith.constant dense<0.000000e+00> : vector<1xf32>
    %147 = vector.multi_reduction <add>, %146, %cst_48 [1, 2] : vector<1x4x1xf32> to vector<1xf32>
    %148 = vector.shape_cast %147 : vector<1xf32> to vector<1x1x1xf32>
    %149 = vector.extract %148[0, 0, 0] : f32 from vector<1x1x1xf32>
    %cst_49 = arith.constant 1.024000e+03 : f32
    %150 = arith.divf %149, %cst_49 : f32
    %151 = vector.extract_strided_slice %144 {offsets = [0, 0], sizes = [4, 1], strides = [1, 1]} : vector<16x1xf32> to vector<4x1xf32>
    %152 = vector.shape_cast %151 : vector<4x1xf32> to vector<1x4x1xf32>
    %cst_50 = arith.constant dense<0.000000e+00> : vector<1xf32>
    %153 = vector.multi_reduction <add>, %152, %cst_50 [1, 2] : vector<1x4x1xf32> to vector<1xf32>
    %154 = vector.shape_cast %153 : vector<1xf32> to vector<1x1x1xf32>
    %155 = vector.extract %154[0, 0, 0] : f32 from vector<1x1x1xf32>
    %cst_51 = arith.constant 1.024000e+03 : f32
    %156 = arith.divf %155, %cst_51 : f32
    %157 = arith.mulf %150, %150 : f32
    %158 = arith.subf %156, %157 : f32
    %cst_52 = arith.constant 9.99999974E-6 : f32
    %159 = arith.addf %158, %cst_52 : f32
    %160 = math.rsqrt %159 : f32
    %161 = vector.extract_strided_slice %138 {offsets = [0, 0], sizes = [4, 1], strides = [1, 1]} : vector<16x1xf32> to vector<4x1xf32>
    %162 = vector.broadcast %160 : f32 to vector<4x1xf32>
    %163 = arith.mulf %161, %162 : vector<4x1xf32>
    %164 = vector.extract_strided_slice %139 {offsets = [0, 0], sizes = [4, 1], strides = [1, 1]} : vector<16x1xf32> to vector<4x1xf32>
    %165 = vector.broadcast %150 : f32 to vector<4x1xf32>
    %166 = arith.mulf %165, %163 : vector<4x1xf32>
    %167 = arith.subf %164, %166 : vector<4x1xf32>
    %168 = vector.extract_strided_slice %141 {offsets = [4, 0], sizes = [4, 1], strides = [1, 1]} : vector<16x1xf32> to vector<4x1xf32>
    %169 = vector.shape_cast %168 : vector<4x1xf32> to vector<1x4x1xf32>
    %cst_53 = arith.constant dense<0.000000e+00> : vector<1xf32>
    %170 = vector.multi_reduction <add>, %169, %cst_53 [1, 2] : vector<1x4x1xf32> to vector<1xf32>
    %171 = vector.shape_cast %170 : vector<1xf32> to vector<1x1x1xf32>
    %172 = vector.extract %171[0, 0, 0] : f32 from vector<1x1x1xf32>
    %cst_54 = arith.constant 1.024000e+03 : f32
    %173 = arith.divf %172, %cst_54 : f32
    %174 = vector.extract_strided_slice %144 {offsets = [4, 0], sizes = [4, 1], strides = [1, 1]} : vector<16x1xf32> to vector<4x1xf32>
    %175 = vector.shape_cast %174 : vector<4x1xf32> to vector<1x4x1xf32>
    %cst_55 = arith.constant dense<0.000000e+00> : vector<1xf32>
    %176 = vector.multi_reduction <add>, %175, %cst_55 [1, 2] : vector<1x4x1xf32> to vector<1xf32>
    %177 = vector.shape_cast %176 : vector<1xf32> to vector<1x1x1xf32>
    %178 = vector.extract %177[0, 0, 0] : f32 from vector<1x1x1xf32>
    %cst_56 = arith.constant 1.024000e+03 : f32
    %179 = arith.divf %178, %cst_56 : f32
    %180 = arith.mulf %173, %173 : f32
    %181 = arith.subf %179, %180 : f32
    %cst_57 = arith.constant 9.99999974E-6 : f32
    %182 = arith.addf %181, %cst_57 : f32
    %183 = math.rsqrt %182 : f32
    %184 = vector.extract_strided_slice %138 {offsets = [4, 0], sizes = [4, 1], strides = [1, 1]} : vector<16x1xf32> to vector<4x1xf32>
    %185 = vector.broadcast %183 : f32 to vector<4x1xf32>
    %186 = arith.mulf %184, %185 : vector<4x1xf32>
    %187 = vector.extract_strided_slice %139 {offsets = [4, 0], sizes = [4, 1], strides = [1, 1]} : vector<16x1xf32> to vector<4x1xf32>
    %188 = vector.broadcast %173 : f32 to vector<4x1xf32>
    %189 = arith.mulf %188, %186 : vector<4x1xf32>
    %190 = arith.subf %187, %189 : vector<4x1xf32>
    %191 = vector.extract_strided_slice %141 {offsets = [8, 0], sizes = [4, 1], strides = [1, 1]} : vector<16x1xf32> to vector<4x1xf32>
    %192 = vector.shape_cast %191 : vector<4x1xf32> to vector<1x4x1xf32>
    %cst_58 = arith.constant dense<0.000000e+00> : vector<1xf32>
    %193 = vector.multi_reduction <add>, %192, %cst_58 [1, 2] : vector<1x4x1xf32> to vector<1xf32>
    %194 = vector.shape_cast %193 : vector<1xf32> to vector<1x1x1xf32>
    %195 = vector.extract %194[0, 0, 0] : f32 from vector<1x1x1xf32>
    %cst_59 = arith.constant 1.024000e+03 : f32
    %196 = arith.divf %195, %cst_59 : f32
    %197 = vector.extract_strided_slice %144 {offsets = [8, 0], sizes = [4, 1], strides = [1, 1]} : vector<16x1xf32> to vector<4x1xf32>
    %198 = vector.shape_cast %197 : vector<4x1xf32> to vector<1x4x1xf32>
    %cst_60 = arith.constant dense<0.000000e+00> : vector<1xf32>
    %199 = vector.multi_reduction <add>, %198, %cst_60 [1, 2] : vector<1x4x1xf32> to vector<1xf32>
    %200 = vector.shape_cast %199 : vector<1xf32> to vector<1x1x1xf32>
    %201 = vector.extract %200[0, 0, 0] : f32 from vector<1x1x1xf32>
    %cst_61 = arith.constant 1.024000e+03 : f32
    %202 = arith.divf %201, %cst_61 : f32
    %203 = arith.mulf %196, %196 : f32
    %204 = arith.subf %202, %203 : f32
    %cst_62 = arith.constant 9.99999974E-6 : f32
    %205 = arith.addf %204, %cst_62 : f32
    %206 = math.rsqrt %205 : f32
    %207 = vector.extract_strided_slice %138 {offsets = [8, 0], sizes = [4, 1], strides = [1, 1]} : vector<16x1xf32> to vector<4x1xf32>
    %208 = vector.broadcast %206 : f32 to vector<4x1xf32>
    %209 = arith.mulf %207, %208 : vector<4x1xf32>
    %210 = vector.extract_strided_slice %139 {offsets = [8, 0], sizes = [4, 1], strides = [1, 1]} : vector<16x1xf32> to vector<4x1xf32>
    %211 = vector.broadcast %196 : f32 to vector<4x1xf32>
    %212 = arith.mulf %211, %209 : vector<4x1xf32>
    %213 = arith.subf %210, %212 : vector<4x1xf32>
    %214 = vector.extract_strided_slice %141 {offsets = [12, 0], sizes = [4, 1], strides = [1, 1]} : vector<16x1xf32> to vector<4x1xf32>
    %215 = vector.shape_cast %214 : vector<4x1xf32> to vector<1x4x1xf32>
    %cst_63 = arith.constant dense<0.000000e+00> : vector<1xf32>
    %216 = vector.multi_reduction <add>, %215, %cst_63 [1, 2] : vector<1x4x1xf32> to vector<1xf32>
    %217 = vector.shape_cast %216 : vector<1xf32> to vector<1x1x1xf32>
    %218 = vector.extract %217[0, 0, 0] : f32 from vector<1x1x1xf32>
    %cst_64 = arith.constant 1.024000e+03 : f32
    %219 = arith.divf %218, %cst_64 : f32
    %220 = vector.extract_strided_slice %144 {offsets = [12, 0], sizes = [4, 1], strides = [1, 1]} : vector<16x1xf32> to vector<4x1xf32>
    %221 = vector.shape_cast %220 : vector<4x1xf32> to vector<1x4x1xf32>
    %cst_65 = arith.constant dense<0.000000e+00> : vector<1xf32>
    %222 = vector.multi_reduction <add>, %221, %cst_65 [1, 2] : vector<1x4x1xf32> to vector<1xf32>
    %223 = vector.shape_cast %222 : vector<1xf32> to vector<1x1x1xf32>
    %224 = vector.extract %223[0, 0, 0] : f32 from vector<1x1x1xf32>
    %cst_66 = arith.constant 1.024000e+03 : f32
    %225 = arith.divf %224, %cst_66 : f32
    %226 = arith.mulf %219, %219 : f32
    %227 = arith.subf %225, %226 : f32
    %cst_67 = arith.constant 9.99999974E-6 : f32
    %228 = arith.addf %227, %cst_67 : f32
    %229 = math.rsqrt %228 : f32
    %230 = vector.extract_strided_slice %138 {offsets = [12, 0], sizes = [4, 1], strides = [1, 1]} : vector<16x1xf32> to vector<4x1xf32>
    %231 = vector.broadcast %229 : f32 to vector<4x1xf32>
    %232 = arith.mulf %230, %231 : vector<4x1xf32>
    %233 = vector.extract_strided_slice %139 {offsets = [12, 0], sizes = [4, 1], strides = [1, 1]} : vector<16x1xf32> to vector<4x1xf32>
    %234 = vector.broadcast %219 : f32 to vector<4x1xf32>
    %235 = arith.mulf %234, %232 : vector<4x1xf32>
    %236 = arith.subf %233, %235 : vector<4x1xf32>
    %237 = tpu.concatenate %163, %186, %209, %232 in 0 : vector<4x1xf32>, vector<4x1xf32>, vector<4x1xf32>, vector<4x1xf32> -> vector<16x1xf32>
    %238 = tpu.concatenate %167, %190, %213, %236 in 0 : vector<4x1xf32>, vector<4x1xf32>, vector<4x1xf32>, vector<4x1xf32> -> vector<16x1xf32>
    %239 = vector.broadcast %237 : vector<16x1xf32> to vector<16x256xf32>
    %240 = arith.mulf %137, %239 : vector<16x256xf32>
    %241 = vector.broadcast %238 : vector<16x1xf32> to vector<16x256xf32>
    %242 = arith.addf %240, %241 : vector<16x256xf32>
    %cst_68 = arith.constant 0.000000e+00 : f32
    %243 = vector.broadcast %cst_68 : f32 to vector<16x256xf32>
    %244 = arith.cmpf oge, %242, %243 : vector<16x256xf32>
    %cst_69 = arith.constant 2.000000e-01 : f32
    %245 = vector.broadcast %cst_69 : f32 to vector<16x256xf32>
    %246 = arith.mulf %245, %242 : vector<16x256xf32>
    %247 = arith.select %244, %242, %246 : vector<16x256xi1>, vector<16x256xf32>
    %c0_70 = arith.constant 0 : index
    %c0_71 = arith.constant 0 : index
    %248 = vector.load %arg13[%c0_70, %c0_71] : memref<16x1xf32, #tpu.memory_space<vmem>>, vector<16x1xf32>
    %249 = vector.broadcast %248 : vector<16x1xf32> to vector<16x256xf32>
    %250 = arith.mulf %249, %247 : vector<16x256xf32>
    %cst_72 = arith.constant dense<0.000000e+00> : vector<256xf32>
    %251 = vector.multi_reduction <add>, %250, %cst_72 [0] : vector<16x256xf32> to vector<256xf32>
    %252 = vector.shape_cast %251 : vector<256xf32> to vector<1x256xf32>
    %c0_73 = arith.constant 0 : index
    %c0_74 = arith.constant 0 : index
    %253 = vector.load %arg14[%c0_73, %c0_74] : memref<1x1xf32, #tpu.memory_space<vmem>>, vector<1x1xf32>
    %254 = vector.broadcast %253 : vector<1x1xf32> to vector<1x256xf32>
    %255 = arith.addf %252, %254 : vector<1x256xf32>
    %256 = arith.subf %1, %255 : vector<1x256xf32>
    %c0_75 = arith.constant 0 : index
    %c0_76 = arith.constant 0 : index
    %257 = vector.load %arg3[%c0_75, %c0_76] : memref<1x256xf32, #tpu.memory_space<vmem>>, vector<1x256xf32>
    %258 = math.cos %256 : vector<1x256xf32>
    %259 = arith.mulf %257, %258 : vector<1x256xf32>
    %c0_77 = arith.constant 0 : index
    %c0_78 = arith.constant 0 : index
    %c0_79 = arith.constant 0 : index
    %260 = vector.load %arg15[%c0_77, %c0_78, %c0_79] : memref<1x1x256xf32, #tpu.memory_space<vmem>>, vector<1x1x256xf32>
    %261 = vector.shape_cast %260 : vector<1x1x256xf32> to vector<1x256xf32>
    %262 = vector.shape_cast %259 : vector<1x256xf32> to vector<1x1x256xf32>
    tpu.vector_store %arg15[%c0_77, %c0_78, %c0_79], %262 {strides = array<i32>} : memref<1x1x256xf32, #tpu.memory_space<vmem>>, vector<1x1x256xf32>,
    %263 = math.sin %256 : vector<1x256xf32>
    %264 = arith.mulf %257, %263 : vector<1x256xf32>
    %c0_80 = arith.constant 0 : index
    %c0_81 = arith.constant 0 : index
    %c0_82 = arith.constant 0 : index
    %265 = vector.load %arg16[%c0_80, %c0_81, %c0_82] : memref<1x1x256xf32, #tpu.memory_space<vmem>>, vector<1x1x256xf32>
    %266 = vector.shape_cast %265 : vector<1x1x256xf32> to vector<1x256xf32>
    %267 = vector.shape_cast %264 : vector<1x256xf32> to vector<1x1x256xf32>
    tpu.vector_store %arg16[%c0_80, %c0_81, %c0_82], %267 {strides = array<i32>} : memref<1x1x256xf32, #tpu.memory_space<vmem>>, vector<1x1x256xf32>,
    return
  }
  func.func @transform_0(%arg0: i32) -> (i32, i32, i32) {
    %c0_i32 = arith.constant 0 : i32
    %c0_i32_0 = arith.constant 0 : i32
    %c0_i32_1 = arith.constant 0 : i32
    return %arg0, %c0_i32, %c0_i32_0 : i32, i32, i32
  }
  func.func @transform_1(%arg0: i32) -> (i32, i32) {
    %c0_i32 = arith.constant 0 : i32
    %c0_i32_0 = arith.constant 0 : i32
    %c0_i32_1 = arith.constant 0 : i32
    return %c0_i32, %c0_i32_0 : i32, i32
  }
  func.func @transform_2(%arg0: i32) -> (i32, i32) {
    %c0_i32 = arith.constant 0 : i32
    %c0_i32_0 = arith.constant 0 : i32
    %c0_i32_1 = arith.constant 0 : i32
    return %c0_i32, %c0_i32_0 : i32, i32
  }
  func.func @transform_3(%arg0: i32) -> (i32, i32) {
    %c0_i32 = arith.constant 0 : i32
    %c0_i32_0 = arith.constant 0 : i32
    %c0_i32_1 = arith.constant 0 : i32
    return %c0_i32, %c0_i32_0 : i32, i32
  }
  func.func @transform_4(%arg0: i32) -> (i32, i32) {
    %c0_i32 = arith.constant 0 : i32
    %c0_i32_0 = arith.constant 0 : i32
    %c0_i32_1 = arith.constant 0 : i32
    return %c0_i32, %c0_i32_0 : i32, i32
  }
  func.func @transform_5(%arg0: i32) -> (i32, i32) {
    %c0_i32 = arith.constant 0 : i32
    %c0_i32_0 = arith.constant 0 : i32
    %c0_i32_1 = arith.constant 0 : i32
    return %c0_i32, %c0_i32_0 : i32, i32
  }
  func.func @transform_6(%arg0: i32) -> (i32, i32) {
    %c0_i32 = arith.constant 0 : i32
    %c0_i32_0 = arith.constant 0 : i32
    %c0_i32_1 = arith.constant 0 : i32
    return %c0_i32, %c0_i32_0 : i32, i32
  }
  func.func @transform_7(%arg0: i32) -> (i32, i32) {
    %c0_i32 = arith.constant 0 : i32
    %c0_i32_0 = arith.constant 0 : i32
    %c0_i32_1 = arith.constant 0 : i32
    return %c0_i32, %c0_i32_0 : i32, i32
  }
  func.func @transform_8(%arg0: i32) -> (i32, i32) {
    %c0_i32 = arith.constant 0 : i32
    %c0_i32_0 = arith.constant 0 : i32
    %c0_i32_1 = arith.constant 0 : i32
    return %c0_i32, %c0_i32_0 : i32, i32
  }
  func.func @transform_9(%arg0: i32) -> (i32, i32) {
    %c0_i32 = arith.constant 0 : i32
    %c0_i32_0 = arith.constant 0 : i32
    %c0_i32_1 = arith.constant 0 : i32
    return %c0_i32, %c0_i32_0 : i32, i32
  }
  func.func @transform_10(%arg0: i32) -> (i32, i32) {
    %c0_i32 = arith.constant 0 : i32
    %c0_i32_0 = arith.constant 0 : i32
    %c0_i32_1 = arith.constant 0 : i32
    return %c0_i32, %c0_i32_0 : i32, i32
  }
  func.func @transform_11(%arg0: i32) -> (i32, i32) {
    %c0_i32 = arith.constant 0 : i32
    %c0_i32_0 = arith.constant 0 : i32
    %c0_i32_1 = arith.constant 0 : i32
    return %c0_i32, %c0_i32_0 : i32, i32
  }
  func.func @transform_12(%arg0: i32) -> (i32, i32) {
    %c0_i32 = arith.constant 0 : i32
    %c0_i32_0 = arith.constant 0 : i32
    %c0_i32_1 = arith.constant 0 : i32
    return %c0_i32, %c0_i32_0 : i32, i32
  }
  func.func @transform_13(%arg0: i32) -> (i32, i32) {
    %c0_i32 = arith.constant 0 : i32
    %c0_i32_0 = arith.constant 0 : i32
    %c0_i32_1 = arith.constant 0 : i32
    return %c0_i32, %c0_i32_0 : i32, i32
  }
  func.func @transform_14(%arg0: i32) -> (i32, i32, i32) {
    %c0_i32 = arith.constant 0 : i32
    %c0_i32_0 = arith.constant 0 : i32
    %c0_i32_1 = arith.constant 0 : i32
    return %arg0, %c0_i32, %c0_i32_0 : i32, i32, i32
  }
  func.func @transform_15(%arg0: i32) -> (i32, i32, i32) {
    %c0_i32 = arith.constant 0 : i32
    %c0_i32_0 = arith.constant 0 : i32
    %c0_i32_1 = arith.constant 0 : i32
    return %arg0, %c0_i32, %c0_i32_0 : i32, i32, i32
  }
}

</mosaic_0001>

<llo_original>
// kernel: tpu_custom_call.1
$region0: #{tpu_custom_call.1}
  #allocation0 [shape = 'u32[]', space=smem, size = 0x4, offset = 0x4, fixed_abs, tag = 'smem constant byte address 0x4 - core index']
  #allocation1 [shape = 'u32[72,128]{1,0:T(1,128)}', space=vmem, size = 0x9000, scoped, tag = 'internal scratch']
  #allocation2 [shape = 'f32[1,1]{1,0:T(1,128)S(1)}', space=vmem, size = 0x200, scoped, tag = 'scoped memory for tpu_custom_call.1']
  %s0 = inlined_call_operand.vmem [shape: f32[2,1,256], index: 0, kind: input, shape index: {}]
  %s1 = inlined_call_operand.vmem [shape: f32[2,256], index: 1, kind: input, shape index: {}]
  %s2 = inlined_call_operand.vmem [shape: f32[1,256], index: 2, kind: input, shape index: {}]
  %s3 = inlined_call_operand.vmem [shape: f32[16,1], index: 3, kind: input, shape index: {}]
  %s4 = inlined_call_operand.vmem [shape: f32[16,2], index: 4, kind: input, shape index: {}]
  %s5 = inlined_call_operand.vmem [shape: f32[16,1], index: 5, kind: input, shape index: {}]
  %s6 = inlined_call_operand.vmem [shape: f32[16,1], index: 6, kind: input, shape index: {}]
  %s7 = inlined_call_operand.vmem [shape: f32[16,1], index: 7, kind: input, shape index: {}]
  %s8 = inlined_call_operand.vmem [shape: f32[16,16], index: 8, kind: input, shape index: {}]
  %s9 = inlined_call_operand.vmem [shape: f32[16,1], index: 9, kind: input, shape index: {}]
  %s10 = inlined_call_operand.vmem [shape: f32[16,1], index: 10, kind: input, shape index: {}]
  %s11 = inlined_call_operand.vmem [shape: f32[16,1], index: 11, kind: input, shape index: {}]
  %s12 = inlined_call_operand.vmem [shape: f32[16,1], index: 12, kind: input, shape index: {}]
  %s13 = inlined_call_operand.<no memory space> [shape: f32[1,1], index: 13, kind: input, shape index: {}]
  %s14 = inlined_call_operand.hbm [shape: f32[2,1,256], index: 14, kind: output, shape index: {0}]
  %s15 = inlined_call_operand.hbm [shape: f32[2,1,256], index: 15, kind: output, shape index: {1}]
  %16 = xla_tuple %s14, %s15
  %s17 = sld [smem:[#allocation0]]
  $region97: #{tpu_custom_call.1} parent=0
    _
  %s19 = ssub.s32 1, %s17
  %s20 = scalar_select 0, %s19, %s17
  %v21 = vstv %s13
  %22 = vst [vmem:[#allocation2] sm:$0x1] %v21
  $region1: #{tpu_custom_call.1} parent=0
    #allocation3 [shape = 'u8[2048]{0}', space=vmem, size = 0x800, scoped, tag = 'output window, operand 0']
    #allocation4 [shape = 's32[2]{0}', space=sflag, size = 0x8, scoped, tag = 'scoped memory for tpu_custom_call.1']
    #allocation5 [shape = 'u8[2048]{0}', space=vmem, size = 0x800, scoped, tag = 'output window, operand 1']
    #allocation6 [shape = 's32[2]{0}', space=sflag, size = 0x8, scoped, tag = 'scoped memory for tpu_custom_call.1']
    %23 = vsyncpa [#allocation4], 0
    %s24 = scalar_lea.sflag [#allocation4], 1
    %25 = vsyncpa %s24, 0
    %26 = vsyncpa [#allocation6], 0
    %s27 = scalar_lea.sflag [#allocation6], 1
    %28 = vsyncpa %s27, 0
    loop: start=0, step=1, limit=4
    $region2: #{tpu_custom_call.1} parent=1 // loop_pre_header
      _
    $region3: #{tpu_custom_call.1} parent=1 // loop_header
      %s30 = sphi 0, %s34
      %p31 = scmp.ge.s32.totalorder %s30, 4
      %s40 = sphi 0, %s42
      %s43 = sphi 0, %s40
      %s44 = sphi 0, %s43
      %s60 = sphi 0, %s44
      %s64 = sphi 0, %s64
      %s66 = sphi 0, %s64
      %s67 = sphi 0, %s66
      %s81 = sphi 0, %s67
      %s85 = sphi 0, %s85
      %s87 = sphi 0, %s85
      %s88 = sphi 0, %s87
      %s102 = sphi 0, %s88
      %s106 = sphi 0, %s106
      %s108 = sphi 0, %s106
      %s109 = sphi 0, %s108
      %s123 = sphi 0, %s109
      %s127 = sphi 0, %s127
      %s129 = sphi 0, %s127
      %s130 = sphi 0, %s129
      %s144 = sphi 0, %s130
      %s148 = sphi 0, %s148
      %s150 = sphi 0, %s148
      %s151 = sphi 0, %s150
      %s165 = sphi 0, %s151
      %s169 = sphi 0, %s169
      %s171 = sphi 0, %s169
      %s172 = sphi 0, %s171
      %s186 = sphi 0, %s172
      %s190 = sphi 0, %s190
      %s192 = sphi 0, %s190
      %s193 = sphi 0, %s192
      %s207 = sphi 0, %s193
      %s211 = sphi 0, %s211
      %s213 = sphi 0, %s211
      %s214 = sphi 0, %s213
      %s228 = sphi 0, %s214
      %s232 = sphi 0, %s232
      %s234 = sphi 0, %s232
      %s235 = sphi 0, %s234
      %s249 = sphi 0, %s235
      %s253 = sphi 0, %s253
      %s255 = sphi 0, %s253
      %s256 = sphi 0, %s255
      %s270 = sphi 0, %s256
      %s274 = sphi 0, %s274
      %s276 = sphi 0, %s274
      %s277 = sphi 0, %s276
      %s291 = sphi 0, %s277
      %s295 = sphi 0, %s295
      %s297 = sphi 0, %s295
      %s298 = sphi 0, %s297
      %s312 = sphi 0, %s298
      %s316 = sphi 0, %s316
      %s318 = sphi 0, %s316
      %s319 = sphi 0, %s318
      %s333 = sphi 0, %s319
      %s339 = sphi 0, %s341
      %s342 = sphi 0, %s339
      %s343 = sphi 0, %s342
      %s359 = sphi 0, %s343
      %s365 = sphi 0, %s367
      %s368 = sphi 0, %s365
      %s369 = sphi 0, %s368
      %s385 = sphi 0, %s369
    $region4: #{tpu_custom_call.1} parent=1 // loop_header_branch
      %33 = sbr.rel (%p31) target = $region8
    $region5: #{tpu_custom_call.1} parent=1 // loop_body
      %s35 = ssub.s32 %s30, 1
      %s36 = ssub.s32 %s30, 2
      %s37 = sadd.s32 %s30, 1
      %s38 = ssub.s32 %s30, %s37
      %p39 = scmp.eq.s32.totalorder %s38, 0
      %s41 = sadd.s32 %s40, 1
      %s42 = scalar_select %p39, %s40, %s41
      %p45 = pneg %p39
      %p46 = scmp.eq.s32.totalorder %s30, 1
      %p47 = por %p45, %p46
      %p48 = scmp.ne.s32.totalorder %s40, %s43
      %p49 = scmp.eq.s32.totalorder %s30, 0
      %p50 = por %p48, %p49
      %p51 = scmp.ne.s32.totalorder %s40, %s43
      %p52 = scmp.eq.s32.totalorder %s35, 1
      %p53 = por %p51, %p52
      %p54 = scmp.ne.s32.totalorder %s43, %s44
      %p55 = scmp.eq.s32.totalorder %s35, 0
      %p56 = por %p54, %p55
      %p57 = scmp.ne.s32.totalorder %s43, %s44
      %p58 = scmp.eq.s32.totalorder %s36, 1
      %p59 = por %p57, %p58
      %p61 = scmp.ne.s32.totalorder %s44, %s60
      %p62 = scmp.eq.s32.totalorder %s36, 0
      %p63 = por %p61, %p62
      %s65 = sadd.s32 %s64, 1
      %p68 = scmp.eq.s32.totalorder %s30, 1
      %p69 = scmp.ne.s32.totalorder %s64, %s66
      %p70 = scmp.eq.s32.totalorder %s30, 0
      %p71 = por %p69, %p70
      %p72 = scmp.ne.s32.totalorder %s64, %s66
      %p73 = scmp.eq.s32.totalorder %s35, 1
      %p74 = por %p72, %p73
      %p75 = scmp.ne.s32.totalorder %s66, %s67
      %p76 = scmp.eq.s32.totalorder %s35, 0
      %p77 = por %p75, %p76
      %p78 = scmp.ne.s32.totalorder %s66, %s67
      %p79 = scmp.eq.s32.totalorder %s36, 1
      %p80 = por %p78, %p79
      %p82 = scmp.ne.s32.totalorder %s67, %s81
      %p83 = scmp.eq.s32.totalorder %s36, 0
      %p84 = por %p82, %p83
      %s86 = sadd.s32 %s85, 1
      %p89 = scmp.eq.s32.totalorder %s30, 1
      %p90 = scmp.ne.s32.totalorder %s85, %s87
      %p91 = scmp.eq.s32.totalorder %s30, 0
      %p92 = por %p90, %p91
      %p93 = scmp.ne.s32.totalorder %s85, %s87
      %p94 = scmp.eq.s32.totalorder %s35, 1
      %p95 = por %p93, %p94
      %p96 = scmp.ne.s32.totalorder %s87, %s88
      %p97 = scmp.eq.s32.totalorder %s35, 0
      %p98 = por %p96, %p97
      %p99 = scmp.ne.s32.totalorder %s87, %s88
      %p100 = scmp.eq.s32.totalorder %s36, 1
      %p101 = por %p99, %p100
      %p103 = scmp.ne.s32.totalorder %s88, %s102
      %p104 = scmp.eq.s32.totalorder %s36, 0
      %p105 = por %p103, %p104
      %s107 = sadd.s32 %s106, 1
      %p110 = scmp.eq.s32.totalorder %s30, 1
      %p111 = scmp.ne.s32.totalorder %s106, %s108
      %p112 = scmp.eq.s32.totalorder %s30, 0
      %p113 = por %p111, %p112
      %p114 = scmp.ne.s32.totalorder %s106, %s108
      %p115 = scmp.eq.s32.totalorder %s35, 1
      %p116 = por %p114, %p115
      %p117 = scmp.ne.s32.totalorder %s108, %s109
      %p118 = scmp.eq.s32.totalorder %s35, 0
      %p119 = por %p117, %p118
      %p120 = scmp.ne.s32.totalorder %s108, %s109
      %p121 = scmp.eq.s32.totalorder %s36, 1
      %p122 = por %p120, %p121
      %p124 = scmp.ne.s32.totalorder %s109, %s123
      %p125 = scmp.eq.s32.totalorder %s36, 0
      %p126 = por %p124, %p125
      %s128 = sadd.s32 %s127, 1
      %p131 = scmp.eq.s32.totalorder %s30, 1
      %p132 = scmp.ne.s32.totalorder %s127, %s129
      %p133 = scmp.eq.s32.totalorder %s30, 0
      %p134 = por %p132, %p133
      %p135 = scmp.ne.s32.totalorder %s127, %s129
      %p136 = scmp.eq.s32.totalorder %s35, 1
      %p137 = por %p135, %p136
      %p138 = scmp.ne.s32.totalorder %s129, %s130
      %p139 = scmp.eq.s32.totalorder %s35, 0
      %p140 = por %p138, %p139
      %p141 = scmp.ne.s32.totalorder %s129, %s130
      %p142 = scmp.eq.s32.totalorder %s36, 1
      %p143 = por %p141, %p142
      %p145 = scmp.ne.s32.totalorder %s130, %s144
      %p146 = scmp.eq.s32.totalorder %s36, 0
      %p147 = por %p145, %p146
      %s149 = sadd.s32 %s148, 1
      %p152 = scmp.eq.s32.totalorder %s30, 1
      %p153 = scmp.ne.s32.totalorder %s148, %s150
      %p154 = scmp.eq.s32.totalorder %s30, 0
      %p155 = por %p153, %p154
      %p156 = scmp.ne.s32.totalorder %s148, %s150
      %p157 = scmp.eq.s32.totalorder %s35, 1
      %p158 = por %p156, %p157
      %p159 = scmp.ne.s32.totalorder %s150, %s151
      %p160 = scmp.eq.s32.totalorder %s35, 0
      %p161 = por %p159, %p160
      %p162 = scmp.ne.s32.totalorder %s150, %s151
      %p163 = scmp.eq.s32.totalorder %s36, 1
      %p164 = por %p162, %p163
      %p166 = scmp.ne.s32.totalorder %s151, %s165
      %p167 = scmp.eq.s32.totalorder %s36, 0
      %p168 = por %p166, %p167
      %s170 = sadd.s32 %s169, 1
      %p173 = scmp.eq.s32.totalorder %s30, 1
      %p174 = scmp.ne.s32.totalorder %s169, %s171
      %p175 = scmp.eq.s32.totalorder %s30, 0
      %p176 = por %p174, %p175
      %p177 = scmp.ne.s32.totalorder %s169, %s171
      %p178 = scmp.eq.s32.totalorder %s35, 1
      %p179 = por %p177, %p178
      %p180 = scmp.ne.s32.totalorder %s171, %s172
      %p181 = scmp.eq.s32.totalorder %s35, 0
      %p182 = por %p180, %p181
      %p183 = scmp.ne.s32.totalorder %s171, %s172
      %p184 = scmp.eq.s32.totalorder %s36, 1
      %p185 = por %p183, %p184
      %p187 = scmp.ne.s32.totalorder %s172, %s186
      %p188 = scmp.eq.s32.totalorder %s36, 0
      %p189 = por %p187, %p188
      %s191 = sadd.s32 %s190, 1
      %p194 = scmp.eq.s32.totalorder %s30, 1
      %p195 = scmp.ne.s32.totalorder %s190, %s192
      %p196 = scmp.eq.s32.totalorder %s30, 0
      %p197 = por %p195, %p196
      %p198 = scmp.ne.s32.totalorder %s190, %s192
      %p199 = scmp.eq.s32.totalorder %s35, 1
      %p200 = por %p198, %p199
      %p201 = scmp.ne.s32.totalorder %s192, %s193
      %p202 = scmp.eq.s32.totalorder %s35, 0
      %p203 = por %p201, %p202
      %p204 = scmp.ne.s32.totalorder %s192, %s193
      %p205 = scmp.eq.s32.totalorder %s36, 1
      %p206 = por %p204, %p205
      %p208 = scmp.ne.s32.totalorder %s193, %s207
      %p209 = scmp.eq.s32.totalorder %s36, 0
      %p210 = por %p208, %p209
      %s212 = sadd.s32 %s211, 1
      %p215 = scmp.eq.s32.totalorder %s30, 1
      %p216 = scmp.ne.s32.totalorder %s211, %s213
      %p217 = scmp.eq.s32.totalorder %s30, 0
      %p218 = por %p216, %p217
      %p219 = scmp.ne.s32.totalorder %s211, %s213
      %p220 = scmp.eq.s32.totalorder %s35, 1
      %p221 = por %p219, %p220
      %p222 = scmp.ne.s32.totalorder %s213, %s214
      %p223 = scmp.eq.s32.totalorder %s35, 0
      %p224 = por %p222, %p223
      %p225 = scmp.ne.s32.totalorder %s213, %s214
      %p226 = scmp.eq.s32.totalorder %s36, 1
      %p227 = por %p225, %p226
      %p229 = scmp.ne.s32.totalorder %s214, %s228
      %p230 = scmp.eq.s32.totalorder %s36, 0
      %p231 = por %p229, %p230
      %s233 = sadd.s32 %s232, 1
      %p236 = scmp.eq.s32.totalorder %s30, 1
      %p237 = scmp.ne.s32.totalorder %s232, %s234
      %p238 = scmp.eq.s32.totalorder %s30, 0
      %p239 = por %p237, %p238
      %p240 = scmp.ne.s32.totalorder %s232, %s234
      %p241 = scmp.eq.s32.totalorder %s35, 1
      %p242 = por %p240, %p241
      %p243 = scmp.ne.s32.totalorder %s234, %s235
      %p244 = scmp.eq.s32.totalorder %s35, 0
      %p245 = por %p243, %p244
      %p246 = scmp.ne.s32.totalorder %s234, %s235
      %p247 = scmp.eq.s32.totalorder %s36, 1
      %p248 = por %p246, %p247
      %p250 = scmp.ne.s32.totalorder %s235, %s249
      %p251 = scmp.eq.s32.totalorder %s36, 0
      %p252 = por %p250, %p251
      %s254 = sadd.s32 %s253, 1
      %p257 = scmp.eq.s32.totalorder %s30, 1
      %p258 = scmp.ne.s32.totalorder %s253, %s255
      %p259 = scmp.eq.s32.totalorder %s30, 0
      %p260 = por %p258, %p259
      %p261 = scmp.ne.s32.totalorder %s253, %s255
      %p262 = scmp.eq.s32.totalorder %s35, 1
      %p263 = por %p261, %p262
      %p264 = scmp.ne.s32.totalorder %s255, %s256
      %p265 = scmp.eq.s32.totalorder %s35, 0
      %p266 = por %p264, %p265
      %p267 = scmp.ne.s32.totalorder %s255, %s256
      %p268 = scmp.eq.s32.totalorder %s36, 1
      %p269 = por %p267, %p268
      %p271 = scmp.ne.s32.totalorder %s256, %s270
      %p272 = scmp.eq.s32.totalorder %s36, 0
      %p273 = por %p271, %p272
      %s275 = sadd.s32 %s274, 1
      %p278 = scmp.eq.s32.totalorder %s30, 1
      %p279 = scmp.ne.s32.totalorder %s274, %s276
      %p280 = scmp.eq.s32.totalorder %s30, 0
      %p281 = por %p279, %p280
      %p282 = scmp.ne.s32.totalorder %s274, %s276
      %p283 = scmp.eq.s32.totalorder %s35, 1
      %p284 = por %p282, %p283
      %p285 = scmp.ne.s32.totalorder %s276, %s277
      %p286 = scmp.eq.s32.totalorder %s35, 0
      %p287 = por %p285, %p286
      %p288 = scmp.ne.s32.totalorder %s276, %s277
      %p289 = scmp.eq.s32.totalorder %s36, 1
      %p290 = por %p288, %p289
      %p292 = scmp.ne.s32.totalorder %s277, %s291
      %p293 = scmp.eq.s32.totalorder %s36, 0
      %p294 = por %p292, %p293
      %s296 = sadd.s32 %s295, 1
      %p299 = scmp.eq.s32.totalorder %s30, 1
      %p300 = scmp.ne.s32.totalorder %s295, %s297
      %p301 = scmp.eq.s32.totalorder %s30, 0
      %p302 = por %p300, %p301
      %p303 = scmp.ne.s32.totalorder %s295, %s297
      %p304 = scmp.eq.s32.totalorder %s35, 1
      %p305 = por %p303, %p304
      %p306 = scmp.ne.s32.totalorder %s297, %s298
      %p307 = scmp.eq.s32.totalorder %s35, 0
      %p308 = por %p306, %p307
      %p309 = scmp.ne.s32.totalorder %s297, %s298
      %p310 = scmp.eq.s32.totalorder %s36, 1
      %p311 = por %p309, %p310
      %p313 = scmp.ne.s32.totalorder %s298, %s312
      %p314 = scmp.eq.s32.totalorder %s36, 0
      %p315 = por %p313, %p314
      %s317 = sadd.s32 %s316, 1
      %p320 = scmp.eq.s32.totalorder %s30, 1
      %p321 = scmp.ne.s32.totalorder %s316, %s318
      %p322 = scmp.eq.s32.totalorder %s30, 0
      %p323 = por %p321, %p322
      %p324 = scmp.ne.s32.totalorder %s316, %s318
      %p325 = scmp.eq.s32.totalorder %s35, 1
      %p326 = por %p324, %p325
      %p327 = scmp.ne.s32.totalorder %s318, %s319
      %p328 = scmp.eq.s32.totalorder %s35, 0
      %p329 = por %p327, %p328
      %p330 = scmp.ne.s32.totalorder %s318, %s319
      %p331 = scmp.eq.s32.totalorder %s36, 1
      %p332 = por %p330, %p331
      %p334 = scmp.ne.s32.totalorder %s319, %s333
      %p335 = scmp.eq.s32.totalorder %s36, 0
      %p336 = por %p334, %p335
      %s337 = ssub.s32 %s30, %s37
      %p338 = scmp.eq.s32.totalorder %s337, 0
      %s340 = sadd.s32 %s339, 1
      %s341 = scalar_select %p338, %s339, %s340
      %p344 = pneg %p338
      %p345 = scmp.eq.s32.totalorder %s30, 1
      %p346 = por %p344, %p345
      %p347 = scmp.ne.s32.totalorder %s339, %s342
      %p348 = scmp.eq.s32.totalorder %s30, 0
      %p349 = por %p347, %p348
      %p350 = scmp.ne.s32.totalorder %s339, %s342
      %p351 = scmp.eq.s32.totalorder %s35, 1
      %p352 = por %p350, %p351
      %p353 = scmp.ne.s32.totalorder %s342, %s343
      %p354 = scmp.eq.s32.totalorder %s35, 0
      %p355 = por %p353, %p354
      %p356 = scmp.ne.s32.totalorder %s342, %s343
      %p357 = scmp.eq.s32.totalorder %s36, 1
      %p358 = por %p356, %p357
      %p360 = scmp.ne.s32.totalorder %s343, %s359
      %p361 = scmp.eq.s32.totalorder %s36, 0
      %p362 = por %p360, %p361
      %s363 = ssub.s32 %s30, %s37
      %p364 = scmp.eq.s32.totalorder %s363, 0
      %s366 = sadd.s32 %s365, 1
      %s367 = scalar_select %p364, %s365, %s366
      %p370 = pneg %p364
      %p371 = scmp.eq.s32.totalorder %s30, 1
      %p372 = por %p370, %p371
      %p373 = scmp.ne.s32.totalorder %s365, %s368
      %p374 = scmp.eq.s32.totalorder %s30, 0
      %p375 = por %p373, %p374
      %p376 = scmp.ne.s32.totalorder %s365, %s368
      %p377 = scmp.eq.s32.totalorder %s35, 1
      %p378 = por %p376, %p377
      %p379 = scmp.ne.s32.totalorder %s368, %s369
      %p380 = scmp.eq.s32.totalorder %s35, 0
      %p381 = por %p379, %p380
      %p382 = scmp.ne.s32.totalorder %s368, %s369
      %p383 = scmp.eq.s32.totalorder %s36, 1
      %p384 = por %p382, %p383
      %p386 = scmp.ne.s32.totalorder %s369, %s385
      %p387 = scmp.eq.s32.totalorder %s36, 0
      %p388 = por %p386, %p387
      %p389 = scmp.le.s32.totalorder 1, %s30
      %p390 = scmp.lt.s32.totalorder %s30, 3
      %p391 = pnand %p389, %p390
      %p392 = pneg %p391
      // Predicated region
      $region9: #{tpu_custom_call.1} parent=5 // pred_check
        _
      $region10: #{tpu_custom_call.1} parent=5 // pred_check_branch
        %394 = sbr.rel (%p391) target = $region12
      $region11: #{tpu_custom_call.1} parent=5 // pred_region
        %s395 = ssub.s32 %s30, 1
        // Predicated region
        $region13: #{tpu_custom_call.1} parent=11 // pred_check
          %p396 = pneg %p77
        $region14: #{tpu_custom_call.1} parent=11 // pred_check_branch
          %398 = sbr.rel (%p396) target = $region16
        $region15: #{tpu_custom_call.1} parent=11 // pred_region
          _
        $region16: #{tpu_custom_call.1} parent=11 // pred_fallthru
          _
        // Predicated region
        $region17: #{tpu_custom_call.1} parent=11 // pred_check
          %p399 = pneg %p98
        $region18: #{tpu_custom_call.1} parent=11 // pred_check_branch
          %401 = sbr.rel (%p399) target = $region20
        $region19: #{tpu_custom_call.1} parent=11 // pred_region
          _
        $region20: #{tpu_custom_call.1} parent=11 // pred_fallthru
          _
        // Predicated region
        $region21: #{tpu_custom_call.1} parent=11 // pred_check
          %p402 = pneg %p119
        $region22: #{tpu_custom_call.1} parent=11 // pred_check_branch
          %404 = sbr.rel (%p402) target = $region24
        $region23: #{tpu_custom_call.1} parent=11 // pred_region
          _
        $region24: #{tpu_custom_call.1} parent=11 // pred_fallthru
          _
        // Predicated region
        $region25: #{tpu_custom_call.1} parent=11 // pred_check
          %p405 = pneg %p140
        $region26: #{tpu_custom_call.1} parent=11 // pred_check_branch
          %407 = sbr.rel (%p405) target = $region28
        $region27: #{tpu_custom_call.1} parent=11 // pred_region
          _
        $region28: #{tpu_custom_call.1} parent=11 // pred_fallthru
          _
        // Predicated region
        $region29: #{tpu_custom_call.1} parent=11 // pred_check
          %p408 = pneg %p161
        $region30: #{tpu_custom_call.1} parent=11 // pred_check_branch
          %410 = sbr.rel (%p408) target = $region32
        $region31: #{tpu_custom_call.1} parent=11 // pred_region
          _
        $region32: #{tpu_custom_call.1} parent=11 // pred_fallthru
          _
        // Predicated region
        $region33: #{tpu_custom_call.1} parent=11 // pred_check
          %p411 = pneg %p182
        $region34: #{tpu_custom_call.1} parent=11 // pred_check_branch
          %413 = sbr.rel (%p411) target = $region36
        $region35: #{tpu_custom_call.1} parent=11 // pred_region
          _
        $region36: #{tpu_custom_call.1} parent=11 // pred_fallthru
          _
        // Predicated region
        $region37: #{tpu_custom_call.1} parent=11 // pred_check
          %p414 = pneg %p203
        $region38: #{tpu_custom_call.1} parent=11 // pred_check_branch
          %416 = sbr.rel (%p414) target = $region40
        $region39: #{tpu_custom_call.1} parent=11 // pred_region
          _
        $region40: #{tpu_custom_call.1} parent=11 // pred_fallthru
          _
        // Predicated region
        $region41: #{tpu_custom_call.1} parent=11 // pred_check
          %p417 = pneg %p224
        $region42: #{tpu_custom_call.1} parent=11 // pred_check_branch
          %419 = sbr.rel (%p417) target = $region44
        $region43: #{tpu_custom_call.1} parent=11 // pred_region
          _
        $region44: #{tpu_custom_call.1} parent=11 // pred_fallthru
          _
        // Predicated region
        $region45: #{tpu_custom_call.1} parent=11 // pred_check
          %p420 = pneg %p245
        $region46: #{tpu_custom_call.1} parent=11 // pred_check_branch
          %422 = sbr.rel (%p420) target = $region48
        $region47: #{tpu_custom_call.1} parent=11 // pred_region
          _
        $region48: #{tpu_custom_call.1} parent=11 // pred_fallthru
          _
        // Predicated region
        $region49: #{tpu_custom_call.1} parent=11 // pred_check
          %p423 = pneg %p266
        $region50: #{tpu_custom_call.1} parent=11 // pred_check_branch
          %425 = sbr.rel (%p423) target = $region52
        $region51: #{tpu_custom_call.1} parent=11 // pred_region
          _
        $region52: #{tpu_custom_call.1} parent=11 // pred_fallthru
          _
        // Predicated region
        $region53: #{tpu_custom_call.1} parent=11 // pred_check
          %p426 = pneg %p287
        $region54: #{tpu_custom_call.1} parent=11 // pred_check_branch
          %428 = sbr.rel (%p426) target = $region56
        $region55: #{tpu_custom_call.1} parent=11 // pred_region
          _
        $region56: #{tpu_custom_call.1} parent=11 // pred_fallthru
          _
        // Predicated region
        $region57: #{tpu_custom_call.1} parent=11 // pred_check
          %p429 = pneg %p308
        $region58: #{tpu_custom_call.1} parent=11 // pred_check_branch
          %431 = sbr.rel (%p429) target = $region60
        $region59: #{tpu_custom_call.1} parent=11 // pred_region
          _
        $region60: #{tpu_custom_call.1} parent=11 // pred_fallthru
          _
        // Predicated region
        $region61: #{tpu_custom_call.1} parent=11 // pred_check
          %p432 = pneg %p329
        $region62: #{tpu_custom_call.1} parent=11 // pred_check_branch
          %434 = sbr.rel (%p432) target = $region64
        $region63: #{tpu_custom_call.1} parent=11 // pred_region
          _
        $region64: #{tpu_custom_call.1} parent=11 // pred_fallthru
          _
      $region12: #{tpu_custom_call.1} parent=5 // pred_fallthru
        _
      %p435 = scmp.lt.s32.totalorder %s30, 2
      // Predicated region
      $region65: #{tpu_custom_call.1} parent=5 // pred_check
        %p436 = pneg %p435
      $region66: #{tpu_custom_call.1} parent=5 // pred_check_branch
        %438 = sbr.rel (%p436) target = $region68
      $region67: #{tpu_custom_call.1} parent=5 // pred_region
        // Predicated region
        $region69: #{tpu_custom_call.1} parent=67 // pred_check
          %p439 = pneg %p50
        $region70: #{tpu_custom_call.1} parent=67 // pred_check_branch
          %441 = sbr.rel (%p439) target = $region72
        $region71: #{tpu_custom_call.1} parent=67 // pred_region
          %p442 = scmp.lt.s32.totalorder %s30, 1
          %s443 = scalar_select %p442, %s30, 1
          %s444 = smul.addr %s443, 2
          %s445 = scalar_lea.vmem %s0, %s444
        $region72: #{tpu_custom_call.1} parent=67 // pred_fallthru
          _
      $region68: #{tpu_custom_call.1} parent=5 // pred_fallthru
        _
      %p446 = scmp.le.s32.totalorder 1, %s30
      %p447 = scmp.lt.s32.totalorder %s30, 3
      %p448 = pnand %p446, %p447
      %p449 = pneg %p448
      // Predicated region
      $region73: #{tpu_custom_call.1} parent=5 // pred_check
        _
      $region74: #{tpu_custom_call.1} parent=5 // pred_check_branch
        %451 = sbr.rel (%p448) target = $region76
      $region75: #{tpu_custom_call.1} parent=5 // pred_region
        %s452 = ssub.s32 %s30, 1
        %p453 = scmp.lt.s32.totalorder %s35, 1
        %s454 = scalar_select %p453, %s35, 1
        %s455 = smul.addr %s454, 2
        %s456 = scalar_lea.vmem %s0, %s455
        %p457 = pneg %p56
        %p458 = pneg %p53
        %p459 = pneg %p77
        %p460 = pneg %p74
        %p461 = pneg %p98
        %p462 = pneg %p95
        %p463 = pneg %p119
        %p464 = pneg %p116
        %p465 = pneg %p140
        %p466 = pneg %p137
        %p467 = pneg %p161
        %p468 = pneg %p158
        %p469 = pneg %p182
        %p470 = pneg %p179
        %p471 = pneg %p203
        %p472 = pneg %p200
        %p473 = pneg %p224
        %p474 = pneg %p221
        %p475 = pneg %p245
        %p476 = pneg %p242
        %p477 = pneg %p266
        %p478 = pneg %p263
        %p479 = pneg %p287
        %p480 = pneg %p284
        %p481 = pneg %p308
        %p482 = pneg %p305
        %p483 = pneg %p329
        %p484 = pneg %p326
        %p485 = pneg %p355
        %p486 = pneg %p352
        %s487 = sand.u32 %s342, 1
        %s488 = scalar_lea.sflag [#allocation4], %s487
        %s489 = sand.u32 %s342, 1
        %s490 = smul.addr %s489, 2
        %s491 = scalar_lea.vmem [#allocation3], %s490
        %p492 = pneg %p381
        %p493 = pneg %p378
        %s494 = sand.u32 %s368, 1
        %s495 = scalar_lea.sflag [#allocation6], %s494
        %s496 = sand.u32 %s368, 1
        %s497 = smul.addr %s496, 2
        %s498 = scalar_lea.vmem [#allocation5], %s497
        %p499 = scmp.lt.s32.totalorder %s35, 1
        %s500 = scalar_select %p499, %s35, 1
        %s501 = smul.addr %s500, 2
        %s502 = scalar_lea.vmem %s0, %s501
        %v503 = vld [vmem:[%s502] sm:$0x3]
        %v504 = vld [vmem:[%s1] sm:$0xf]
        %v505 = vld [vmem:[%s4] sm:$0xff]
        %v506 = vld [vmem:[%s4 + $0x8] sm:$0xff]
        %v507 = vld [vmem:[%s3] sm:$0xff]
        %v508 = vld [vmem:[%s3 + $0x8] sm:$0xff]
        %510 = vset.pattern.permute.xlu0 0
        %511 = vperm.xlu0 %510, %v507
        %v512 = vpop.permute.xlu0 %511
        %515 = vset.pattern.permute.xlu0 0
        %516 = vperm.xlu0 %515, %v508
        %v517 = vpop.permute.xlu0 %516
        %v520 = vperm.slane %v503, 0
        %v521 = vperm.slane %v503, 1
        %v524 = vmul.f32 %v512, %v520
        %v525 = vmul.f32 %v512, %v521
        %v526 = vmul.f32 %v517, %v520
        %v527 = vmul.f32 %v517, %v521
        %529 = vset.pattern.permute.xlu0 0
        %530 = vperm.xlu0 %529, %v505
        %v531 = vpop.permute.xlu0 %530
        %534 = vset.pattern.permute.xlu0 0
        %535 = vperm.xlu0 %534, %v506
        %v536 = vpop.permute.xlu0 %535
        %v539 = vperm.slane %v504, 0
        %v540 = vperm.slane %v504, 2
        %v543 = vperm.slane %v539, 0
        %v544 = vperm.slane %v540, 0
        %v545 = vmul.f32 %v531, %v543
        %v546 = vmul.f32 %v531, %v544
        %v547 = vmul.f32 %v536, %v543
        %v548 = vmul.f32 %v536, %v544
        %v549 = vadd.f32 %v524, %v545
        %v550 = vadd.f32 %v525, %v546
        %v551 = vadd.f32 %v526, %v547
        %v552 = vadd.f32 %v527, %v548
        %553 = vset.pattern.permute.xlu0 1
        %554 = vperm.xlu0 %553, %v505
        %v555 = vpop.permute.xlu0 %554
        %557 = vset.pattern.permute.xlu0 1
        %558 = vperm.xlu0 %557, %v506
        %v559 = vpop.permute.xlu0 %558
        %v561 = vperm.slane %v504, 1
        %v562 = vperm.slane %v504, 3
        %v565 = vperm.slane %v561, 1
        %v566 = vperm.slane %v562, 1
        %v567 = vmul.f32 %v555, %v565
        %v568 = vmul.f32 %v555, %v566
        %v569 = vmul.f32 %v559, %v565
        %v570 = vmul.f32 %v559, %v566
        %v571 = vadd.f32 %v549, %v567
        %v572 = vadd.f32 %v550, %v568
        %v573 = vadd.f32 %v551, %v569
        %v574 = vadd.f32 %v552, %v570
        %v575 = vld [vmem:[%s5] sm:$0xff]
        %v576 = vld [vmem:[%s5 + $0x8] sm:$0xff]
        %578 = vset.pattern.permute.xlu0 0
        %579 = vperm.xlu0 %578, %v575
        %v580 = vpop.permute.xlu0 %579
        %583 = vset.pattern.permute.xlu0 0
        %584 = vperm.xlu0 %583, %v576
        %v585 = vpop.permute.xlu0 %584
        %v587 = vadd.f32 %v571, %v580
        %v588 = vadd.f32 %v572, %v580
        %v589 = vadd.f32 %v573, %v585
        %v590 = vadd.f32 %v574, %v585
        %v591 = vld [vmem:[%s6] sm:$0xff]
        %v592 = vld [vmem:[%s6 + $0x8] sm:$0xff]
        %v593 = vld [vmem:[%s7] sm:$0xff]
        %v594 = vld [vmem:[%s7 + $0x8] sm:$0xff]
        %v595 = vadd.f32 %v587, %v588
        %596 = vadd.xlane.f32.xlu0 %v595
        %v597 = vpop.xlane.xlu0 %596
        %v598 = vadd.f32 %v589, %v590
        %599 = vadd.xlane.f32.xlu0 %v598
        %v600 = vpop.xlane.xlu0 %599
        %v601 = vmul.f32 %v587, %v587
        %v602 = vmul.f32 %v588, %v588
        %v603 = vmul.f32 %v589, %v589
        %v604 = vmul.f32 %v590, %v590
        %v605 = vadd.f32 %v601, %v602
        %606 = vadd.xlane.f32.xlu0 %v605
        %v607 = vpop.xlane.xlu0 %606
        %v608 = vadd.f32 %v603, %v604
        %609 = vadd.xlane.f32.xlu0 %v608
        %v610 = vpop.xlane.xlu0 %609
        %vm611 = vcmask 3072
        %v612 = vsel %vm611, %v597, 0.0
        %613 = vadd.xlane.f32.xlu0 %v612
        %v614 = vpop.xlane.xlu0 %613
        %v615 = vrot.slane %v614, 4
        %v616 = vadd.f32 %v614, %v615
        %v617 = vrot.slane %v616, 2
        %v618 = vadd.f32 %v616, %v617
        %v619 = vrot.slane %v618, 1
        %v620 = vadd.f32 %v618, %v619
        %s621 = vtos %v620
        %v622 = vrcp.pop 1024.0
        %v623 = vmul.f32 1024.0, %v622
        %v624 = vsub.f32 1.0, %v623
        %v625 = vmul.f32 %v622, %v624
        %v626 = vadd.f32 %v622, %v625
        %vm627 = vweird.f32 %v622
        %v628 = vsel %vm627, %v622, %v626
        %s629 = vtos %v628
        %s630 = smul.f32 %s621, %s629
        %v631 = vsel %vm611, %v607, 0.0
        %632 = vadd.xlane.f32.xlu0 %v631
        %v633 = vpop.xlane.xlu0 %632
        %v634 = vrot.slane %v633, 4
        %v635 = vadd.f32 %v633, %v634
        %v636 = vrot.slane %v635, 2
        %v637 = vadd.f32 %v635, %v636
        %v638 = vrot.slane %v637, 1
        %v639 = vadd.f32 %v637, %v638
        %s640 = vtos %v639
        %v641 = vrcp.pop 1024.0
        %v642 = vmul.f32 1024.0, %v641
        %v643 = vsub.f32 1.0, %v642
        %v644 = vmul.f32 %v641, %v643
        %v645 = vadd.f32 %v641, %v644
        %vm646 = vweird.f32 %v641
        %v647 = vsel %vm646, %v641, %v645
        %s648 = vtos %v647
        %s649 = smul.f32 %s640, %s648
        %s650 = smul.f32 %s630, %s630
        %s651 = ssub.f32 %s649, %s650
        %s652 = sadd.f32 %s651, 1e-05
        %v653 = vstv %s652
        %v654 = vrsqrt.pop %v653
        %v655 = vmul.f32 %v654, %v653
        %v656 = vmul.f32 %v655, %v654
        %v657 = vmul.f32 0.5, %v656
        %v658 = vsub.f32 1.5, %v657
        %v659 = vmul.f32 %v654, %v658
        %vm660 = vweird.f32 %v653
        %vm661 = vweird.f32 %v654
        %vm662 = vmor %vm660, %vm661
        %v663 = vsel %vm662, %v654, %v659
        %s664 = vtos %v663
        %v665 = vstv %s664
        %v666 = vmul.f32 %v591, %v665
        %v667 = vstv %s630
        %v668 = vmul.f32 %v667, %v666
        %v669 = vsub.f32 %v593, %v668
        %v671 = vrot.slane %v597, 4
        %v673 = vsel %vm611, %v671, 0.0
        %674 = vadd.xlane.f32.xlu0 %v673
        %v675 = vpop.xlane.xlu0 %674
        %v676 = vrot.slane %v675, 4
        %v677 = vadd.f32 %v675, %v676
        %v678 = vrot.slane %v677, 2
        %v679 = vadd.f32 %v677, %v678
        %v680 = vrot.slane %v679, 1
        %v681 = vadd.f32 %v679, %v680
        %s682 = vtos %v681
        %v683 = vrcp.pop 1024.0
        %v684 = vmul.f32 1024.0, %v683
        %v685 = vsub.f32 1.0, %v684
        %v686 = vmul.f32 %v683, %v685
        %v687 = vadd.f32 %v683, %v686
        %vm688 = vweird.f32 %v683
        %v689 = vsel %vm688, %v683, %v687
        %s690 = vtos %v689
        %s691 = smul.f32 %s682, %s690
        %v693 = vrot.slane %v607, 4
        %v695 = vsel %vm611, %v693, 0.0
        %696 = vadd.xlane.f32.xlu0 %v695
        %v697 = vpop.xlane.xlu0 %696
        %v698 = vrot.slane %v697, 4
        %v699 = vadd.f32 %v697, %v698
        %v700 = vrot.slane %v699, 2
        %v701 = vadd.f32 %v699, %v700
        %v702 = vrot.slane %v701, 1
        %v703 = vadd.f32 %v701, %v702
        %s704 = vtos %v703
        %v705 = vrcp.pop 1024.0
        %v706 = vmul.f32 1024.0, %v705
        %v707 = vsub.f32 1.0, %v706
        %v708 = vmul.f32 %v705, %v707
        %v709 = vadd.f32 %v705, %v708
        %vm710 = vweird.f32 %v705
        %v711 = vsel %vm710, %v705, %v709
        %s712 = vtos %v711
        %s713 = smul.f32 %s704, %s712
        %s714 = smul.f32 %s691, %s691
        %s715 = ssub.f32 %s713, %s714
        %s716 = sadd.f32 %s715, 1e-05
        %v717 = vstv %s716
        %v718 = vrsqrt.pop %v717
        %v719 = vmul.f32 %v718, %v717
        %v720 = vmul.f32 %v719, %v718
        %v721 = vmul.f32 0.5, %v720
        %v722 = vsub.f32 1.5, %v721
        %v723 = vmul.f32 %v718, %v722
        %vm724 = vweird.f32 %v717
        %vm725 = vweird.f32 %v718
        %vm726 = vmor %vm724, %vm725
        %v727 = vsel %vm726, %v718, %v723
        %s728 = vtos %v727
        %v729 = vstv %s728
        %v730 = vmul.f32 %v591, %v729
        %v731 = vstv %s691
        %v732 = vmul.f32 %v731, %v730
        %v733 = vsub.f32 %v593, %v732
        %v734 = vsel %vm611, %v600, 0.0
        %735 = vadd.xlane.f32.xlu0 %v734
        %v736 = vpop.xlane.xlu0 %735
        %v737 = vrot.slane %v736, 4
        %v738 = vadd.f32 %v736, %v737
        %v739 = vrot.slane %v738, 2
        %v740 = vadd.f32 %v738, %v739
        %v741 = vrot.slane %v740, 1
        %v742 = vadd.f32 %v740, %v741
        %s743 = vtos %v742
        %v744 = vrcp.pop 1024.0
        %v745 = vmul.f32 1024.0, %v744
        %v746 = vsub.f32 1.0, %v745
        %v747 = vmul.f32 %v744, %v746
        %v748 = vadd.f32 %v744, %v747
        %vm749 = vweird.f32 %v744
        %v750 = vsel %vm749, %v744, %v748
        %s751 = vtos %v750
        %s752 = smul.f32 %s743, %s751
        %v753 = vsel %vm611, %v610, 0.0
        %754 = vadd.xlane.f32.xlu0 %v753
        %v755 = vpop.xlane.xlu0 %754
        %v756 = vrot.slane %v755, 4
        %v757 = vadd.f32 %v755, %v756
        %v758 = vrot.slane %v757, 2
        %v759 = vadd.f32 %v757, %v758
        %v760 = vrot.slane %v759, 1
        %v761 = vadd.f32 %v759, %v760
        %s762 = vtos %v761
        %v763 = vrcp.pop 1024.0
        %v764 = vmul.f32 1024.0, %v763
        %v765 = vsub.f32 1.0, %v764
        %v766 = vmul.f32 %v763, %v765
        %v767 = vadd.f32 %v763, %v766
        %vm768 = vweird.f32 %v763
        %v769 = vsel %vm768, %v763, %v767
        %s770 = vtos %v769
        %s771 = smul.f32 %s762, %s770
        %s772 = smul.f32 %s752, %s752
        %s773 = ssub.f32 %s771, %s772
        %s774 = sadd.f32 %s773, 1e-05
        %v775 = vstv %s774
        %v776 = vrsqrt.pop %v775
        %v777 = vmul.f32 %v776, %v775
        %v778 = vmul.f32 %v777, %v776
        %v779 = vmul.f32 0.5, %v778
        %v780 = vsub.f32 1.5, %v779
        %v781 = vmul.f32 %v776, %v780
        %vm782 = vweird.f32 %v775
        %vm783 = vweird.f32 %v776
        %vm784 = vmor %vm782, %vm783
        %v785 = vsel %vm784, %v776, %v781
        %s786 = vtos %v785
        %v787 = vstv %s786
        %v788 = vmul.f32 %v592, %v787
        %v789 = vstv %s752
        %v790 = vmul.f32 %v789, %v788
        %v791 = vsub.f32 %v594, %v790
        %v793 = vrot.slane %v600, 4
        %v795 = vsel %vm611, %v793, 0.0
        %796 = vadd.xlane.f32.xlu0 %v795
        %v797 = vpop.xlane.xlu0 %796
        %v798 = vrot.slane %v797, 4
        %v799 = vadd.f32 %v797, %v798
        %v800 = vrot.slane %v799, 2
        %v801 = vadd.f32 %v799, %v800
        %v802 = vrot.slane %v801, 1
        %v803 = vadd.f32 %v801, %v802
        %s804 = vtos %v803
        %v805 = vrcp.pop 1024.0
        %v806 = vmul.f32 1024.0, %v805
        %v807 = vsub.f32 1.0, %v806
        %v808 = vmul.f32 %v805, %v807
        %v809 = vadd.f32 %v805, %v808
        %vm810 = vweird.f32 %v805
        %v811 = vsel %vm810, %v805, %v809
        %s812 = vtos %v811
        %s813 = smul.f32 %s804, %s812
        %v815 = vrot.slane %v610, 4
        %v817 = vsel %vm611, %v815, 0.0
        %818 = vadd.xlane.f32.xlu0 %v817
        %v819 = vpop.xlane.xlu0 %818
        %v820 = vrot.slane %v819, 4
        %v821 = vadd.f32 %v819, %v820
        %v822 = vrot.slane %v821, 2
        %v823 = vadd.f32 %v821, %v822
        %v824 = vrot.slane %v823, 1
        %v825 = vadd.f32 %v823, %v824
        %s826 = vtos %v825
        %v827 = vrcp.pop 1024.0
        %v828 = vmul.f32 1024.0, %v827
        %v829 = vsub.f32 1.0, %v828
        %v830 = vmul.f32 %v827, %v829
        %v831 = vadd.f32 %v827, %v830
        %vm832 = vweird.f32 %v827
        %v833 = vsel %vm832, %v827, %v831
        %s834 = vtos %v833
        %s835 = smul.f32 %s826, %s834
        %s836 = smul.f32 %s813, %s813
        %s837 = ssub.f32 %s835, %s836
        %s838 = sadd.f32 %s837, 1e-05
        %v839 = vstv %s838
        %v840 = vrsqrt.pop %v839
        %v841 = vmul.f32 %v840, %v839
        %v842 = vmul.f32 %v841, %v840
        %v843 = vmul.f32 0.5, %v842
        %v844 = vsub.f32 1.5, %v843
        %v845 = vmul.f32 %v840, %v844
        %vm846 = vweird.f32 %v839
        %vm847 = vweird.f32 %v840
        %vm848 = vmor %vm846, %vm847
        %v849 = vsel %vm848, %v840, %v845
        %s850 = vtos %v849
        %v851 = vstv %s850
        %v852 = vmul.f32 %v592, %v851
        %v853 = vstv %s813
        %v854 = vmul.f32 %v853, %v852
        %v855 = vsub.f32 %v594, %v854
        %vm856 = vcmask 1043456
        %v857 = vsel %vm856, %v666, %v730
        %v858 = vsel %vm856, %v788, %v852
        %v859 = vsel %vm856, %v669, %v733
        %v860 = vsel %vm856, %v791, %v855
        %862 = vset.pattern.permute.xlu0 0
        %863 = vperm.xlu0 %862, %v857
        %v864 = vpop.permute.xlu0 %863
        %867 = vset.pattern.permute.xlu0 0
        %868 = vperm.xlu0 %867, %v858
        %v869 = vpop.permute.xlu0 %868
        %v871 = vmul.f32 %v587, %v864
        %v872 = vmul.f32 %v588, %v864
        %v873 = vmul.f32 %v589, %v869
        %v874 = vmul.f32 %v590, %v869
        %876 = vset.pattern.permute.xlu0 0
        %877 = vperm.xlu0 %876, %v859
        %v878 = vpop.permute.xlu0 %877
        %881 = vset.pattern.permute.xlu0 0
        %882 = vperm.xlu0 %881, %v860
        %v883 = vpop.permute.xlu0 %882
        %v885 = vadd.f32 %v871, %v878
        %v886 = vadd.f32 %v872, %v878
        %v887 = vadd.f32 %v873, %v883
        %v888 = vadd.f32 %v874, %v883
        %vm889 = vcmp.ge.f32.partialorder %v885, 0.0
        %vm890 = vcmp.ge.f32.partialorder %v886, 0.0
        %vm891 = vcmp.ge.f32.partialorder %v887, 0.0
        %vm892 = vcmp.ge.f32.partialorder %v888, 0.0
        %v893 = vmul.f32 %v885, 0.2
        %v894 = vmul.f32 %v886, 0.2
        %v895 = vmul.f32 %v887, 0.2
        %v896 = vmul.f32 %v888, 0.2
        %v897 = vsel %vm889, %v885, %v893
        %v898 = vsel %vm890, %v886, %v894
        %v899 = vsel %vm891, %v887, %v895
        %v900 = vsel %vm892, %v888, %v896
        %v901 = vld [vmem:[%s8] sm:$0xff]
        %v902 = vld [vmem:[%s8 + $0x8] sm:$0xff]
        %v903 = vld [vmem:[%s9] sm:$0xff]
        %v904 = vld [vmem:[%s9 + $0x8] sm:$0xff]
        %906 = vset.pattern.permute.xlu0 0
        %907 = vperm.xlu0 %906, %v903
        %v908 = vpop.permute.xlu0 %907
        %911 = vset.pattern.permute.xlu0 0
        %912 = vperm.xlu0 %911, %v904
        %v913 = vpop.permute.xlu0 %912
        %vm915 = vcmask 130048
        %v917 = vsel %vm915, %v901, 0
        %v920 = vsel %vm915, %v902, 0
        %922 = vmatpush.msra.mxu0 0.0
        %923 = vmatpush.msra.mxu0 0.0
        %924 = vmatpush.msra.mxu0 0.0
        %925 = vmatpush.msra.mxu0 0.0
        %926 = vmatpush.msra.mxu0 0.0
        %927 = vmatpush.msra.mxu0 0.0
        %928 = vmatpush.msra.mxu0 0.0
        %929 = vmatpush.msra.mxu0 0.0
        %930 = vmatpush.msra.mxu0 0.0
        %931 = vmatpush.msra.mxu0 0.0
        %932 = vmatpush.msra.mxu0 0.0
        %933 = vmatpush.msra.mxu0 0.0
        %934 = vmatpush.msra.mxu0 0.0
        %935 = vmatpush.msra.mxu0 0.0
        %936 = vmatpush.msra.mxu0 %v899
        %937 = vmatpush.msra.mxu0 %v897
        %938 = vmatmul.f32.gmra.mxu0 %v917
        %v939 = vpop.f32.mrf.mxu0
        %v940 = vadd.f32 %v908, %v939
        %941 = vmatmul.f32.gmra.mxu0 %v920
        %v942 = vpop.f32.mrf.mxu0
        %v943 = vadd.f32 %v913, %v942
        %944 = vdwg.mxu0
        %945 = vmatpush.msra.mxu0 0.0
        %946 = vmatpush.msra.mxu0 0.0
        %947 = vmatpush.msra.mxu0 0.0
        %948 = vmatpush.msra.mxu0 0.0
        %949 = vmatpush.msra.mxu0 0.0
        %950 = vmatpush.msra.mxu0 0.0
        %951 = vmatpush.msra.mxu0 0.0
        %952 = vmatpush.msra.mxu0 0.0
        %953 = vmatpush.msra.mxu0 0.0
        %954 = vmatpush.msra.mxu0 0.0
        %955 = vmatpush.msra.mxu0 0.0
        %956 = vmatpush.msra.mxu0 0.0
        %957 = vmatpush.msra.mxu0 0.0
        %958 = vmatpush.msra.mxu0 0.0
        %959 = vmatpush.msra.mxu0 %v900
        %960 = vmatpush.msra.mxu0 %v898
        %961 = vmatmul.f32.gmra.mxu0 %v917
        %v962 = vpop.f32.mrf.mxu0
        %v963 = vadd.f32 %v908, %v962
        %964 = vmatmul.f32.gmra.mxu0 %v920
        %v965 = vpop.f32.mrf.mxu0
        %v966 = vadd.f32 %v913, %v965
        %967 = vdwg.mxu0
        %v968 = vld [vmem:[%s10] sm:$0xff]
        %v969 = vld [vmem:[%s10 + $0x8] sm:$0xff]
        %v970 = vld [vmem:[%s11] sm:$0xff]
        %v971 = vld [vmem:[%s11 + $0x8] sm:$0xff]
        %v972 = vadd.f32 %v940, %v963
        %973 = vadd.xlane.f32.xlu0 %v972
        %v974 = vpop.xlane.xlu0 %973
        %v975 = vadd.f32 %v943, %v966
        %976 = vadd.xlane.f32.xlu0 %v975
        %v977 = vpop.xlane.xlu0 %976
        %v978 = vmul.f32 %v940, %v940
        %v979 = vmul.f32 %v963, %v963
        %v980 = vmul.f32 %v943, %v943
        %v981 = vmul.f32 %v966, %v966
        %v982 = vadd.f32 %v978, %v979
        %983 = vadd.xlane.f32.xlu0 %v982
        %v984 = vpop.xlane.xlu0 %983
        %v985 = vadd.f32 %v980, %v981
        %986 = vadd.xlane.f32.xlu0 %v985
        %v987 = vpop.xlane.xlu0 %986
        %v988 = vsel %vm611, %v974, 0.0
        %989 = vadd.xlane.f32.xlu0 %v988
        %v990 = vpop.xlane.xlu0 %989
        %v991 = vrot.slane %v990, 4
        %v992 = vadd.f32 %v990, %v991
        %v993 = vrot.slane %v992, 2
        %v994 = vadd.f32 %v992, %v993
        %v995 = vrot.slane %v994, 1
        %v996 = vadd.f32 %v994, %v995
        %s997 = vtos %v996
        %v998 = vrcp.pop 1024.0
        %v999 = vmul.f32 1024.0, %v998
        %v1000 = vsub.f32 1.0, %v999
        %v1001 = vmul.f32 %v998, %v1000
        %v1002 = vadd.f32 %v998, %v1001
        %vm1003 = vweird.f32 %v998
        %v1004 = vsel %vm1003, %v998, %v1002
        %s1005 = vtos %v1004
        %s1006 = smul.f32 %s997, %s1005
        %v1007 = vsel %vm611, %v984, 0.0
        %1008 = vadd.xlane.f32.xlu0 %v1007
        %v1009 = vpop.xlane.xlu0 %1008
        %v1010 = vrot.slane %v1009, 4
        %v1011 = vadd.f32 %v1009, %v1010
        %v1012 = vrot.slane %v1011, 2
        %v1013 = vadd.f32 %v1011, %v1012
        %v1014 = vrot.slane %v1013, 1
        %v1015 = vadd.f32 %v1013, %v1014
        %s1016 = vtos %v1015
        %v1017 = vrcp.pop 1024.0
        %v1018 = vmul.f32 1024.0, %v1017
        %v1019 = vsub.f32 1.0, %v1018
        %v1020 = vmul.f32 %v1017, %v1019
        %v1021 = vadd.f32 %v1017, %v1020
        %vm1022 = vweird.f32 %v1017
        %v1023 = vsel %vm1022, %v1017, %v1021
        %s1024 = vtos %v1023
        %s1025 = smul.f32 %s1016, %s1024
        %s1026 = smul.f32 %s1006, %s1006
        %s1027 = ssub.f32 %s1025, %s1026
        %s1028 = sadd.f32 %s1027, 1e-05
        %v1029 = vstv %s1028
        %v1030 = vrsqrt.pop %v1029
        %v1031 = vmul.f32 %v1030, %v1029
        %v1032 = vmul.f32 %v1031, %v1030
        %v1033 = vmul.f32 0.5, %v1032
        %v1034 = vsub.f32 1.5, %v1033
        %v1035 = vmul.f32 %v1030, %v1034
        %vm1036 = vweird.f32 %v1029
        %vm1037 = vweird.f32 %v1030
        %vm1038 = vmor %vm1036, %vm1037
        %v1039 = vsel %vm1038, %v1030, %v1035
        %s1040 = vtos %v1039
        %v1041 = vstv %s1040
        %v1042 = vmul.f32 %v968, %v1041
        %v1043 = vstv %s1006
        %v1044 = vmul.f32 %v1043, %v1042
        %v1045 = vsub.f32 %v970, %v1044
        %v1047 = vrot.slane %v974, 4
        %v1049 = vsel %vm611, %v1047, 0.0
        %1050 = vadd.xlane.f32.xlu0 %v1049
        %v1051 = vpop.xlane.xlu0 %1050
        %v1052 = vrot.slane %v1051, 4
        %v1053 = vadd.f32 %v1051, %v1052
        %v1054 = vrot.slane %v1053, 2
        %v1055 = vadd.f32 %v1053, %v1054
        %v1056 = vrot.slane %v1055, 1
        %v1057 = vadd.f32 %v1055, %v1056
        %s1058 = vtos %v1057
        %v1059 = vrcp.pop 1024.0
        %v1060 = vmul.f32 1024.0, %v1059
        %v1061 = vsub.f32 1.0, %v1060
        %v1062 = vmul.f32 %v1059, %v1061
        %v1063 = vadd.f32 %v1059, %v1062
        %vm1064 = vweird.f32 %v1059
        %v1065 = vsel %vm1064, %v1059, %v1063
        %s1066 = vtos %v1065
        %s1067 = smul.f32 %s1058, %s1066
        %v1069 = vrot.slane %v984, 4
        %v1071 = vsel %vm611, %v1069, 0.0
        %1072 = vadd.xlane.f32.xlu0 %v1071
        %v1073 = vpop.xlane.xlu0 %1072
        %v1074 = vrot.slane %v1073, 4
        %v1075 = vadd.f32 %v1073, %v1074
        %v1076 = vrot.slane %v1075, 2
        %v1077 = vadd.f32 %v1075, %v1076
        %v1078 = vrot.slane %v1077, 1
        %v1079 = vadd.f32 %v1077, %v1078
        %s1080 = vtos %v1079
        %v1081 = vrcp.pop 1024.0
        %v1082 = vmul.f32 1024.0, %v1081
        %v1083 = vsub.f32 1.0, %v1082
        %v1084 = vmul.f32 %v1081, %v1083
        %v1085 = vadd.f32 %v1081, %v1084
        %vm1086 = vweird.f32 %v1081
        %v1087 = vsel %vm1086, %v1081, %v1085
        %s1088 = vtos %v1087
        %s1089 = smul.f32 %s1080, %s1088
        %s1090 = smul.f32 %s1067, %s1067
        %s1091 = ssub.f32 %s1089, %s1090
        %s1092 = sadd.f32 %s1091, 1e-05
        %v1093 = vstv %s1092
        %v1094 = vrsqrt.pop %v1093
        %v1095 = vmul.f32 %v1094, %v1093
        %v1096 = vmul.f32 %v1095, %v1094
        %v1097 = vmul.f32 0.5, %v1096
        %v1098 = vsub.f32 1.5, %v1097
        %v1099 = vmul.f32 %v1094, %v1098
        %vm1100 = vweird.f32 %v1093
        %vm1101 = vweird.f32 %v1094
        %vm1102 = vmor %vm1100, %vm1101
        %v1103 = vsel %vm1102, %v1094, %v1099
        %s1104 = vtos %v1103
        %v1105 = vstv %s1104
        %v1106 = vmul.f32 %v968, %v1105
        %v1107 = vstv %s1067
        %v1108 = vmul.f32 %v1107, %v1106
        %v1109 = vsub.f32 %v970, %v1108
        %v1110 = vsel %vm611, %v977, 0.0
        %1111 = vadd.xlane.f32.xlu0 %v1110
        %v1112 = vpop.xlane.xlu0 %1111
        %v1113 = vrot.slane %v1112, 4
        %v1114 = vadd.f32 %v1112, %v1113
        %v1115 = vrot.slane %v1114, 2
        %v1116 = vadd.f32 %v1114, %v1115
        %v1117 = vrot.slane %v1116, 1
        %v1118 = vadd.f32 %v1116, %v1117
        %s1119 = vtos %v1118
        %v1120 = vrcp.pop 1024.0
        %v1121 = vmul.f32 1024.0, %v1120
        %v1122 = vsub.f32 1.0, %v1121
        %v1123 = vmul.f32 %v1120, %v1122
        %v1124 = vadd.f32 %v1120, %v1123
        %vm1125 = vweird.f32 %v1120
        %v1126 = vsel %vm1125, %v1120, %v1124
        %s1127 = vtos %v1126
        %s1128 = smul.f32 %s1119, %s1127
        %v1129 = vsel %vm611, %v987, 0.0
        %1130 = vadd.xlane.f32.xlu0 %v1129
        %v1131 = vpop.xlane.xlu0 %1130
        %v1132 = vrot.slane %v1131, 4
        %v1133 = vadd.f32 %v1131, %v1132
        %v1134 = vrot.slane %v1133, 2
        %v1135 = vadd.f32 %v1133, %v1134
        %v1136 = vrot.slane %v1135, 1
        %v1137 = vadd.f32 %v1135, %v1136
        %s1138 = vtos %v1137
        %v1139 = vrcp.pop 1024.0
        %v1140 = vmul.f32 1024.0, %v1139
        %v1141 = vsub.f32 1.0, %v1140
        %v1142 = vmul.f32 %v1139, %v1141
        %v1143 = vadd.f32 %v1139, %v1142
        %vm1144 = vweird.f32 %v1139
        %v1145 = vsel %vm1144, %v1139, %v1143
        %s1146 = vtos %v1145
        %s1147 = smul.f32 %s1138, %s1146
        %s1148 = smul.f32 %s1128, %s1128
        %s1149 = ssub.f32 %s1147, %s1148
        %s1150 = sadd.f32 %s1149, 1e-05
        %v1151 = vstv %s1150
        %v1152 = vrsqrt.pop %v1151
        %v1153 = vmul.f32 %v1152, %v1151
        %v1154 = vmul.f32 %v1153, %v1152
        %v1155 = vmul.f32 0.5, %v1154
        %v1156 = vsub.f32 1.5, %v1155
        %v1157 = vmul.f32 %v1152, %v1156
        %vm1158 = vweird.f32 %v1151
        %vm1159 = vweird.f32 %v1152
        %vm1160 = vmor %vm1158, %vm1159
        %v1161 = vsel %vm1160, %v1152, %v1157
        %s1162 = vtos %v1161
        %v1163 = vstv %s1162
        %v1164 = vmul.f32 %v969, %v1163
        %v1165 = vstv %s1128
        %v1166 = vmul.f32 %v1165, %v1164
        %v1167 = vsub.f32 %v971, %v1166
        %v1169 = vrot.slane %v977, 4
        %v1171 = vsel %vm611, %v1169, 0.0
        %1172 = vadd.xlane.f32.xlu0 %v1171
        %v1173 = vpop.xlane.xlu0 %1172
        %v1174 = vrot.slane %v1173, 4
        %v1175 = vadd.f32 %v1173, %v1174
        %v1176 = vrot.slane %v1175, 2
        %v1177 = vadd.f32 %v1175, %v1176
        %v1178 = vrot.slane %v1177, 1
        %v1179 = vadd.f32 %v1177, %v1178
        %s1180 = vtos %v1179
        %v1181 = vrcp.pop 1024.0
        %v1182 = vmul.f32 1024.0, %v1181
        %v1183 = vsub.f32 1.0, %v1182
        %v1184 = vmul.f32 %v1181, %v1183
        %v1185 = vadd.f32 %v1181, %v1184
        %vm1186 = vweird.f32 %v1181
        %v1187 = vsel %vm1186, %v1181, %v1185
        %s1188 = vtos %v1187
        %s1189 = smul.f32 %s1180, %s1188
        %v1191 = vrot.slane %v987, 4
        %v1193 = vsel %vm611, %v1191, 0.0
        %1194 = vadd.xlane.f32.xlu0 %v1193
        %v1195 = vpop.xlane.xlu0 %1194
        %v1196 = vrot.slane %v1195, 4
        %v1197 = vadd.f32 %v1195, %v1196
        %v1198 = vrot.slane %v1197, 2
        %v1199 = vadd.f32 %v1197, %v1198
        %v1200 = vrot.slane %v1199, 1
        %v1201 = vadd.f32 %v1199, %v1200
        %s1202 = vtos %v1201
        %v1203 = vrcp.pop 1024.0
        %v1204 = vmul.f32 1024.0, %v1203
        %v1205 = vsub.f32 1.0, %v1204
        %v1206 = vmul.f32 %v1203, %v1205
        %v1207 = vadd.f32 %v1203, %v1206
        %vm1208 = vweird.f32 %v1203
        %v1209 = vsel %vm1208, %v1203, %v1207
        %s1210 = vtos %v1209
        %s1211 = smul.f32 %s1202, %s1210
        %s1212 = smul.f32 %s1189, %s1189
        %s1213 = ssub.f32 %s1211, %s1212
        %s1214 = sadd.f32 %s1213, 1e-05
        %v1215 = vstv %s1214
        %v1216 = vrsqrt.pop %v1215
        %v1217 = vmul.f32 %v1216, %v1215
        %v1218 = vmul.f32 %v1217, %v1216
        %v1219 = vmul.f32 0.5, %v1218
        %v1220 = vsub.f32 1.5, %v1219
        %v1221 = vmul.f32 %v1216, %v1220
        %vm1222 = vweird.f32 %v1215
        %vm1223 = vweird.f32 %v1216
        %vm1224 = vmor %vm1222, %vm1223
        %v1225 = vsel %vm1224, %v1216, %v1221
        %s1226 = vtos %v1225
        %v1227 = vstv %s1226
        %v1228 = vmul.f32 %v969, %v1227
        %v1229 = vstv %s1189
        %v1230 = vmul.f32 %v1229, %v1228
        %v1231 = vsub.f32 %v971, %v1230
        %v1232 = vsel %vm856, %v1042, %v1106
        %v1233 = vsel %vm856, %v1164, %v1228
        %v1234 = vsel %vm856, %v1045, %v1109
        %v1235 = vsel %vm856, %v1167, %v1231
        %1237 = vset.pattern.permute.xlu0 0
        %1238 = vperm.xlu0 %1237, %v1232
        %v1239 = vpop.permute.xlu0 %1238
        %1242 = vset.pattern.permute.xlu0 0
        %1243 = vperm.xlu0 %1242, %v1233
        %v1244 = vpop.permute.xlu0 %1243
        %v1246 = vmul.f32 %v940, %v1239
        %v1247 = vmul.f32 %v963, %v1239
        %v1248 = vmul.f32 %v943, %v1244
        %v1249 = vmul.f32 %v966, %v1244
        %1251 = vset.pattern.permute.xlu0 0
        %1252 = vperm.xlu0 %1251, %v1234
        %v1253 = vpop.permute.xlu0 %1252
        %1256 = vset.pattern.permute.xlu0 0
        %1257 = vperm.xlu0 %1256, %v1235
        %v1258 = vpop.permute.xlu0 %1257
        %v1260 = vadd.f32 %v1246, %v1253
        %v1261 = vadd.f32 %v1247, %v1253
        %v1262 = vadd.f32 %v1248, %v1258
        %v1263 = vadd.f32 %v1249, %v1258
        %vm1264 = vcmp.ge.f32.partialorder %v1260, 0.0
        %vm1265 = vcmp.ge.f32.partialorder %v1261, 0.0
        %vm1266 = vcmp.ge.f32.partialorder %v1262, 0.0
        %vm1267 = vcmp.ge.f32.partialorder %v1263, 0.0
        %v1268 = vmul.f32 %v1260, 0.2
        %v1269 = vmul.f32 %v1261, 0.2
        %v1270 = vmul.f32 %v1262, 0.2
        %v1271 = vmul.f32 %v1263, 0.2
        %v1272 = vsel %vm1264, %v1260, %v1268
        %v1273 = vsel %vm1265, %v1261, %v1269
        %v1274 = vsel %vm1266, %v1262, %v1270
        %v1275 = vsel %vm1267, %v1263, %v1271
        %v1276 = vld [vmem:[%s12] sm:$0xff]
        %v1277 = vld [vmem:[%s12 + $0x8] sm:$0xff]
        %1279 = vset.pattern.permute.xlu0 0
        %1280 = vperm.xlu0 %1279, %v1276
        %v1281 = vpop.permute.xlu0 %1280
        %1284 = vset.pattern.permute.xlu0 0
        %1285 = vperm.xlu0 %1284, %v1277
        %v1286 = vpop.permute.xlu0 %1285
        %v1288 = vmul.f32 %v1281, %v1272
        %v1289 = vmul.f32 %v1281, %v1273
        %v1290 = vmul.f32 %v1286, %v1274
        %v1291 = vmul.f32 %v1286, %v1275
        %v1292 = vadd.f32 %v1288, %v1290
        %v1293 = vrot.slane %v1292, 4
        %v1294 = vadd.f32 %v1292, %v1293
        %v1295 = vrot.slane %v1294, 2
        %v1296 = vadd.f32 %v1294, %v1295
        %v1297 = vrot.slane %v1296, 1
        %v1298 = vadd.f32 %v1296, %v1297
        %v1299 = vadd.f32 %v1289, %v1291
        %v1300 = vrot.slane %v1299, 4
        %v1301 = vadd.f32 %v1299, %v1300
        %v1302 = vrot.slane %v1301, 2
        %v1303 = vadd.f32 %v1301, %v1302
        %v1304 = vrot.slane %v1303, 1
        %v1305 = vadd.f32 %v1303, %v1304
        %v1306 = vld [vmem:[#allocation2] sm:$0x1]
        %1308 = vset.pattern.permute.xlu0 0
        %1309 = vperm.xlu0 %1308, %v1306
        %v1310 = vpop.permute.xlu0 %1309
        %v1312 = vperm.slane %v1310, 0
        %v1313 = vadd.f32 %v1298, %v1312
        %v1314 = vadd.f32 %v1305, %v1312
        %v1317 = vrot.slane %v1314, 7
        %vm1318 = vcmask 1040384
        %v1319 = vsel %vm1318, %v1313, %v1317
        %v1321 = vsub.f32 %v503, %v1319
        %v1322 = vld [vmem:[%s2] sm:$0x3]
        %v1323 = vand.u32 2147483647, %v1321
        %vm1324 = vcmp.le.f32.partialorder %v1323, 0.7853982
        %vm1325 = vcmp.lt.s32.totalorder %v1321, 0
        %v1326 = vand.u32 %v1321, 2139095040
        %v1327 = vshrl.u32 %v1326, 23
        %v1328 = vsub.s32 %v1327, 127
        %v1329 = vand.u32 2147483647, %v1321
        %v1330 = vand.u32 %v1329, 8388607
        %v1331 = vor.u32 %v1330, 8388608
        %v1332 = vsub.s32 0, %v1331
        %v1333 = vadd.s32 %v1328, 1
        %vm1334 = vcmp.gt.s32.totalorder %v1333, 0
        %v1335 = vsel %vm1334, %v1333, 0
        %v1336 = vshrl.u32 %v1335, 5
        %v1337 = vand.u32 %v1335, 31
        %v1338 = vsub.s32 32, %v1337
        %v1339 = vshrl.u32 683565275, %v1338
        %v1340 = vshll.u32 683565275, %v1337
        %v1341 = vshrl.u32 2475754826, %v1338
        %v1342 = vor.u32 %v1340, %v1341
        %v1343 = vshll.u32 2475754826, %v1337
        %v1344 = vshrl.u32 2131351028, %v1338
        %v1345 = vor.u32 %v1343, %v1344
        %v1346 = vshll.u32 2131351028, %v1337
        %v1347 = vshrl.u32 2102212464, %v1338
        %v1348 = vor.u32 %v1346, %v1347
        %v1349 = vshll.u32 2102212464, %v1337
        %v1350 = vshrl.u32 920167782, %v1338
        %v1351 = vor.u32 %v1349, %v1350
        %v1352 = vshll.u32 920167782, %v1337
        %v1353 = vshrl.u32 1326507024, %v1338
        %v1354 = vor.u32 %v1352, %v1353
        %vm1355 = vcmp.lt.s32.totalorder %v1336, 1
        %vm1356 = vcmp.lt.s32.totalorder %v1336, 2
        %vm1357 = vcmp.lt.s32.totalorder %v1336, 3
        %vm1358 = vcmp.lt.s32.totalorder %v1336, 4
        %v1359 = vsel %vm1355, %v1339, %v1342
        %v1360 = vsel %vm1358, %v1348, 2102212464
        %v1361 = vsel %vm1357, %v1345, %v1360
        %v1362 = vsel %vm1356, %v1359, %v1361
        %v1363 = vsel %vm1355, %v1342, %v1345
        %v1364 = vsel %vm1358, %v1351, 920167782
        %v1365 = vsel %vm1357, %v1348, %v1364
        %v1366 = vsel %vm1356, %v1363, %v1365
        %v1367 = vsel %vm1355, %v1345, %v1348
        %v1368 = vsel %vm1358, %v1354, 1326507024
        %v1369 = vsel %vm1357, %v1351, %v1368
        %v1370 = vsel %vm1356, %v1367, %v1369
        %v1371 = vshll.u32 %v1331, 8
        %v1372 = vand.u32 %v1371, 65535
        %v1373 = vshrl.u32 %v1371, 16
        %v1374 = vand.u32 %v1370, 65535
        %v1375 = vshrl.u32 %v1370, 16
        %v1376 = vmul.u32 %v1372, %v1374
        %v1377 = vmul.u32 %v1372, %v1375
        %v1378 = vmul.u32 %v1373, %v1374
        %v1379 = vmul.u32 %v1373, %v1375
        %v1380 = vshll.u32 %v1377, 16
        %v1381 = vshrl.u32 %v1377, 16
        %v1382 = vshll.u32 %v1378, 16
        %v1383 = vshrl.u32 %v1378, 16
        %vm1384 = vc.u32 %v1376, %v1380
        %v1385 = vsel %vm1384, 1, 0
        %v1386 = vadd.s32 %v1376, %v1380
        %v1387 = vadd.s32 %v1379, %v1385
        %vm1388 = vc.u32 %v1386, %v1382
        %v1389 = vsel %vm1388, 1, 0
        %v1390 = vadd.s32 %v1386, %v1382
        %v1391 = vadd.s32 %v1387, %v1389
        %v1392 = vadd.s32 %v1391, %v1381
        %v1393 = vadd.s32 %v1392, %v1383
        %v1394 = vand.u32 %v1371, 65535
        %v1395 = vshrl.u32 %v1371, 16
        %v1396 = vand.u32 %v1366, 65535
        %v1397 = vshrl.u32 %v1366, 16
        %v1398 = vmul.u32 %v1394, %v1396
        %v1399 = vmul.u32 %v1394, %v1397
        %v1400 = vmul.u32 %v1395, %v1396
        %v1401 = vmul.u32 %v1395, %v1397
        %v1402 = vshll.u32 %v1399, 16
        %v1403 = vshrl.u32 %v1399, 16
        %v1404 = vshll.u32 %v1400, 16
        %v1405 = vshrl.u32 %v1400, 16
        %vm1406 = vc.u32 %v1398, %v1402
        %v1407 = vsel %vm1406, 1, 0
        %v1408 = vadd.s32 %v1398, %v1402
        %v1409 = vadd.s32 %v1401, %v1407
        %vm1410 = vc.u32 %v1408, %v1404
        %v1411 = vsel %vm1410, 1, 0
        %v1412 = vadd.s32 %v1408, %v1404
        %v1413 = vadd.s32 %v1409, %v1411
        %v1414 = vadd.s32 %v1413, %v1403
        %v1415 = vadd.s32 %v1414, %v1405
        %v1416 = vmul.u32 %v1371, %v1362
        %v1417 = vadd.s32 %v1393, %v1412
        %vm1418 = vc.u32 %v1393, %v1412
        %v1419 = vadd.s32 %v1415, 1
        %v1420 = vsel %vm1418, %v1419, %v1415
        %v1421 = vadd.s32 %v1416, %v1420
        %v1422 = vadd.s32 %v1421, 536870912
        %v1423 = vshrl.u32 %v1422, 30
        %v1424 = vshll.u32 %v1423, 30
        %v1425 = vsub.s32 %v1421, %v1424
        %vm1426 = vcmp.lt.s32.totalorder %v1425, 0
        %v1427 = vsub.s32 0, %v1425
        %v1428 = vsel %vm1426, %v1427, %v1425
        %v1429 = vclz %v1428
        %v1430 = vsub.s32 %v1429, 2
        %vm1431 = vcmp.gt.s32.totalorder 0, %v1430
        %v1432 = vsel %vm1431, 0, %v1430
        %v1433 = vsub.s32 32, %v1432
        %v1434 = vshll.u32 %v1425, %v1432
        %v1435 = vshrl.u32 %v1417, %v1433
        %v1436 = vor.u32 %v1434, %v1435
        %v1437 = vsub.s32 4294967266, %v1432
        %v1438 = vadd.s32 %v1437, 127
        %v1439 = vshll.u32 %v1438, 23
        %v1440 = vor.u32 4788187, %v1439
        %v1441 = vand.u32 2147483647, %v1440
        %v1443 = vcvt.s32.f32 %v1436
        %v1444 = vmul.f32 %v1443, %v1441
        %v1445 = vxor.u32 %v1444, 2147483648
        %v1446 = vsel %vm1325, %v1445, %v1444
        %v1447 = vsub.s32 4, %v1423
        %v1448 = vsel %vm1325, %v1447, %v1423
        %v1449 = vsel %vm1324, %v1321, %v1446
        %v1450 = vsel %vm1324, 0, %v1448
        %v1451 = vmul.f32 %v1449, %v1449
        %v1452 = vmul.f32 %v1451, -0.001358992
        %v1453 = vadd.f32 %v1452, 0.041655596
        %v1454 = vmul.f32 %v1451, %v1453
        %v1455 = vadd.f32 %v1454, -0.4999988
        %v1456 = vmul.f32 %v1451, %v1455
        %v1457 = vadd.f32 1.0, %v1456
        %v1458 = vmul.f32 %v1449, %v1449
        %v1459 = vmul.f32 %v1458, -0.00019511016
        %v1460 = vadd.f32 %v1459, 0.008332121
        %v1461 = vmul.f32 %v1458, %v1460
        %v1462 = vadd.f32 %v1461, -0.16666654
        %v1463 = vmul.f32 %v1458, %v1462
        %v1464 = vadd.f32 %v1463, 1.0
        %v1465 = vmul.f32 %v1464, %v1449
        %vm1466 = vweird.f32 %v1321
        %v1467 = vand.u32 %v1450, 3
        %vm1468 = vcmp.lt.s32.totalorder %v1467, 2
        %vm1469 = vcmp.eq.s32.totalorder %v1467, 0
        %v1470 = vxor.u32 %v1465, 2147483648
        %v1471 = vsel %vm1469, %v1457, %v1470
        %vm1472 = vcmp.eq.s32.totalorder %v1467, 2
        %v1473 = vxor.u32 %v1457, 2147483648
        %v1474 = vsel %vm1472, %v1473, %v1465
        %v1475 = vsel %vm1468, %v1471, %v1474
        %v1476 = vsel %vm1466, nan, %v1475
        %v1477 = vmul.f32 %v1322, %v1476
        %v1478 = vlaneseq
        %vm1479 = vcmp.ge.s32.totalorder %v1478, 0
        %vm1480 = vcmp.lt.s32.totalorder %v1478, 256
        %vm1481 = vmand %vm1479, %vm1480
        %1482 = vst.msk [vmem:[%s491] sm:$0x3] %vm1481, %v1477
        %v1483 = vand.u32 2147483647, %v1321
        %vm1484 = vcmp.le.f32.partialorder %v1483, 0.7853982
        %vm1485 = vcmp.lt.s32.totalorder %v1321, 0
        %v1486 = vand.u32 %v1321, 2139095040
        %v1487 = vshrl.u32 %v1486, 23
        %v1488 = vsub.s32 %v1487, 127
        %v1489 = vand.u32 2147483647, %v1321
        %v1490 = vand.u32 %v1489, 8388607
        %v1491 = vor.u32 %v1490, 8388608
        %v1492 = vsub.s32 0, %v1491
        %v1493 = vadd.s32 %v1488, 1
        %vm1494 = vcmp.gt.s32.totalorder %v1493, 0
        %v1495 = vsel %vm1494, %v1493, 0
        %v1496 = vshrl.u32 %v1495, 5
        %v1497 = vand.u32 %v1495, 31
        %v1498 = vsub.s32 32, %v1497
        %v1499 = vshrl.u32 683565275, %v1498
        %v1500 = vshll.u32 683565275, %v1497
        %v1501 = vshrl.u32 2475754826, %v1498
        %v1502 = vor.u32 %v1500, %v1501
        %v1503 = vshll.u32 2475754826, %v1497
        %v1504 = vshrl.u32 2131351028, %v1498
        %v1505 = vor.u32 %v1503, %v1504
        %v1506 = vshll.u32 2131351028, %v1497
        %v1507 = vshrl.u32 2102212464, %v1498
        %v1508 = vor.u32 %v1506, %v1507
        %v1509 = vshll.u32 2102212464, %v1497
        %v1510 = vshrl.u32 920167782, %v1498
        %v1511 = vor.u32 %v1509, %v1510
        %v1512 = vshll.u32 920167782, %v1497
        %v1513 = vshrl.u32 1326507024, %v1498
        %v1514 = vor.u32 %v1512, %v1513
        %vm1515 = vcmp.lt.s32.totalorder %v1496, 1
        %vm1516 = vcmp.lt.s32.totalorder %v1496, 2
        %vm1517 = vcmp.lt.s32.totalorder %v1496, 3
        %vm1518 = vcmp.lt.s32.totalorder %v1496, 4
        %v1519 = vsel %vm1515, %v1499, %v1502
        %v1520 = vsel %vm1518, %v1508, 2102212464
        %v1521 = vsel %vm1517, %v1505, %v1520
        %v1522 = vsel %vm1516, %v1519, %v1521
        %v1523 = vsel %vm1515, %v1502, %v1505
        %v1524 = vsel %vm1518, %v1511, 920167782
        %v1525 = vsel %vm1517, %v1508, %v1524
        %v1526 = vsel %vm1516, %v1523, %v1525
        %v1527 = vsel %vm1515, %v1505, %v1508
        %v1528 = vsel %vm1518, %v1514, 1326507024
        %v1529 = vsel %vm1517, %v1511, %v1528
        %v1530 = vsel %vm1516, %v1527, %v1529
        %v1531 = vshll.u32 %v1491, 8
        %v1532 = vand.u32 %v1531, 65535
        %v1533 = vshrl.u32 %v1531, 16
        %v1534 = vand.u32 %v1530, 65535
        %v1535 = vshrl.u32 %v1530, 16
        %v1536 = vmul.u32 %v1532, %v1534
        %v1537 = vmul.u32 %v1532, %v1535
        %v1538 = vmul.u32 %v1533, %v1534
        %v1539 = vmul.u32 %v1533, %v1535
        %v1540 = vshll.u32 %v1537, 16
        %v1541 = vshrl.u32 %v1537, 16
        %v1542 = vshll.u32 %v1538, 16
        %v1543 = vshrl.u32 %v1538, 16
        %vm1544 = vc.u32 %v1536, %v1540
        %v1545 = vsel %vm1544, 1, 0
        %v1546 = vadd.s32 %v1536, %v1540
        %v1547 = vadd.s32 %v1539, %v1545
        %vm1548 = vc.u32 %v1546, %v1542
        %v1549 = vsel %vm1548, 1, 0
        %v1550 = vadd.s32 %v1546, %v1542
        %v1551 = vadd.s32 %v1547, %v1549
        %v1552 = vadd.s32 %v1551, %v1541
        %v1553 = vadd.s32 %v1552, %v1543
        %v1554 = vand.u32 %v1531, 65535
        %v1555 = vshrl.u32 %v1531, 16
        %v1556 = vand.u32 %v1526, 65535
        %v1557 = vshrl.u32 %v1526, 16
        %v1558 = vmul.u32 %v1554, %v1556
        %v1559 = vmul.u32 %v1554, %v1557
        %v1560 = vmul.u32 %v1555, %v1556
        %v1561 = vmul.u32 %v1555, %v1557
        %v1562 = vshll.u32 %v1559, 16
        %v1563 = vshrl.u32 %v1559, 16
        %v1564 = vshll.u32 %v1560, 16
        %v1565 = vshrl.u32 %v1560, 16
        %vm1566 = vc.u32 %v1558, %v1562
        %v1567 = vsel %vm1566, 1, 0
        %v1568 = vadd.s32 %v1558, %v1562
        %v1569 = vadd.s32 %v1561, %v1567
        %vm1570 = vc.u32 %v1568, %v1564
        %v1571 = vsel %vm1570, 1, 0
        %v1572 = vadd.s32 %v1568, %v1564
        %v1573 = vadd.s32 %v1569, %v1571
        %v1574 = vadd.s32 %v1573, %v1563
        %v1575 = vadd.s32 %v1574, %v1565
        %v1576 = vmul.u32 %v1531, %v1522
        %v1577 = vadd.s32 %v1553, %v1572
        %vm1578 = vc.u32 %v1553, %v1572
        %v1579 = vadd.s32 %v1575, 1
        %v1580 = vsel %vm1578, %v1579, %v1575
        %v1581 = vadd.s32 %v1576, %v1580
        %v1582 = vadd.s32 %v1581, 536870912
        %v1583 = vshrl.u32 %v1582, 30
        %v1584 = vshll.u32 %v1583, 30
        %v1585 = vsub.s32 %v1581, %v1584
        %vm1586 = vcmp.lt.s32.totalorder %v1585, 0
        %v1587 = vsub.s32 0, %v1585
        %v1588 = vsel %vm1586, %v1587, %v1585
        %v1589 = vclz %v1588
        %v1590 = vsub.s32 %v1589, 2
        %vm1591 = vcmp.gt.s32.totalorder 0, %v1590
        %v1592 = vsel %vm1591, 0, %v1590
        %v1593 = vsub.s32 32, %v1592
        %v1594 = vshll.u32 %v1585, %v1592
        %v1595 = vshrl.u32 %v1577, %v1593
        %v1596 = vor.u32 %v1594, %v1595
        %v1597 = vsub.s32 4294967266, %v1592
        %v1598 = vadd.s32 %v1597, 127
        %v1599 = vshll.u32 %v1598, 23
        %v1600 = vor.u32 4788187, %v1599
        %v1601 = vand.u32 2147483647, %v1600
        %v1603 = vcvt.s32.f32 %v1596
        %v1604 = vmul.f32 %v1603, %v1601
        %v1605 = vxor.u32 %v1604, 2147483648
        %v1606 = vsel %vm1485, %v1605, %v1604
        %v1607 = vsub.s32 4, %v1583
        %v1608 = vsel %vm1485, %v1607, %v1583
        %v1609 = vsel %vm1484, %v1321, %v1606
        %v1610 = vsel %vm1484, 0, %v1608
        %v1611 = vmul.f32 %v1609, %v1609
        %v1612 = vmul.f32 %v1611, -0.001358992
        %v1613 = vadd.f32 %v1612, 0.041655596
        %v1614 = vmul.f32 %v1611, %v1613
        %v1615 = vadd.f32 %v1614, -0.4999988
        %v1616 = vmul.f32 %v1611, %v1615
        %v1617 = vadd.f32 1.0, %v1616
        %v1618 = vmul.f32 %v1609, %v1609
        %v1619 = vmul.f32 %v1618, -0.00019511016
        %v1620 = vadd.f32 %v1619, 0.008332121
        %v1621 = vmul.f32 %v1618, %v1620
        %v1622 = vadd.f32 %v1621, -0.16666654
        %v1623 = vmul.f32 %v1618, %v1622
        %v1624 = vadd.f32 %v1623, 1.0
        %v1625 = vmul.f32 %v1624, %v1609
        %vm1626 = vweird.f32 %v1321
        %v1627 = vadd.s32 %v1610, 3
        %v1628 = vand.u32 %v1627, 3
        %vm1629 = vcmp.lt.s32.totalorder %v1628, 2
        %vm1630 = vcmp.eq.s32.totalorder %v1628, 0
        %v1631 = vxor.u32 %v1625, 2147483648
        %v1632 = vsel %vm1630, %v1617, %v1631
        %vm1633 = vcmp.eq.s32.totalorder %v1628, 2
        %v1634 = vxor.u32 %v1617, 2147483648
        %v1635 = vsel %vm1633, %v1634, %v1625
        %v1636 = vsel %vm1629, %v1632, %v1635
        %v1637 = vsel %vm1626, nan, %v1636
        %v1638 = vmul.f32 %v1322, %v1637
        %1639 = vst.msk [vmem:[%s498] sm:$0x3] %vm1481, %v1638
        %s1640 = sand.u32 %s342, 1
        %s1641 = scalar_lea.sflag [#allocation4], %s1640
        %s1642 = sand.u32 %s342, 1
        %s1643 = smul.addr %s1642, 2
        %s1644 = scalar_lea.vmem [#allocation3], %s1643
        %s1645 = sand.u32 %s368, 1
        %s1646 = scalar_lea.sflag [#allocation6], %s1645
        %s1647 = sand.u32 %s368, 1
        %s1648 = smul.addr %s1647, 2
        %s1649 = scalar_lea.vmem [#allocation5], %s1648
        // Predicated region
        $region77: #{tpu_custom_call.1} parent=75 // pred_check
          %p1650 = pneg %p352
        $region78: #{tpu_custom_call.1} parent=75 // pred_check_branch
          %1652 = sbr.rel (%p1650) target = $region80
        $region79: #{tpu_custom_call.1} parent=75 // pred_region
          %1654 = vsyncadd %s1641, 0
          %s1655 = smul.addr %s35, 2
          %s1656 = scalar_lea.hbm %s14, %s1655
          %s1658 = sshll.u32 %s1644, 4
          %s1659 = int_to_ptr.vmem [resolvable:$true] %s1658
          %s1660 = sshll.u32 %s1656, 4
          %s1661 = int_to_ptr.hbm [resolvable:$true] %s1660
          %1663 = dma.vmem_to_hbm [thread:$0]  %s1659, 32, %s1661, %s1641
        $region80: #{tpu_custom_call.1} parent=75 // pred_fallthru
          _
        // Predicated region
        $region81: #{tpu_custom_call.1} parent=75 // pred_check
          %p1664 = pneg %p378
        $region82: #{tpu_custom_call.1} parent=75 // pred_check_branch
          %1666 = sbr.rel (%p1664) target = $region84
        $region83: #{tpu_custom_call.1} parent=75 // pred_region
          %1668 = vsyncadd %s1646, 0
          %s1669 = smul.addr %s35, 2
          %s1670 = scalar_lea.hbm %s15, %s1669
          %s1672 = sshll.u32 %s1649, 4
          %s1673 = int_to_ptr.vmem [resolvable:$true] %s1672
          %s1674 = sshll.u32 %s1670, 4
          %s1675 = int_to_ptr.hbm [resolvable:$true] %s1674
          %1677 = dma.vmem_to_hbm [thread:$0]  %s1673, 32, %s1675, %s1646
        $region84: #{tpu_custom_call.1} parent=75 // pred_fallthru
          _
      $region76: #{tpu_custom_call.1} parent=5 // pred_fallthru
        _
      %p1678 = scmp.le.s32.totalorder 2, %s30
      // Predicated region
      $region85: #{tpu_custom_call.1} parent=5 // pred_check
        %p1679 = pneg %p1678
      $region86: #{tpu_custom_call.1} parent=5 // pred_check_branch
        %1681 = sbr.rel (%p1679) target = $region88
      $region87: #{tpu_custom_call.1} parent=5 // pred_region
        %s1682 = ssub.s32 %s30, 2
        // Predicated region
        $region89: #{tpu_custom_call.1} parent=87 // pred_check
          %p1683 = pneg %p358
        $region90: #{tpu_custom_call.1} parent=87 // pred_check_branch
          %1685 = sbr.rel (%p1683) target = $region92
        $region91: #{tpu_custom_call.1} parent=87 // pred_region
          %s1686 = sand.u32 %s343, 1
          %s1687 = scalar_lea.sflag [#allocation4], %s1686
          %s1688 = sand.u32 %s343, 1
          %s1689 = smul.addr %s1688, 2
          %s1690 = scalar_lea.vmem [#allocation3], %s1689
          %1692 = dma.done %s1687, 32
        $region92: #{tpu_custom_call.1} parent=87 // pred_fallthru
          _
        // Predicated region
        $region93: #{tpu_custom_call.1} parent=87 // pred_check
          %p1693 = pneg %p384
        $region94: #{tpu_custom_call.1} parent=87 // pred_check_branch
          %1695 = sbr.rel (%p1693) target = $region96
        $region95: #{tpu_custom_call.1} parent=87 // pred_region
          %s1696 = sand.u32 %s369, 1
          %s1697 = scalar_lea.sflag [#allocation6], %s1696
          %s1698 = sand.u32 %s369, 1
          %s1699 = smul.addr %s1698, 2
          %s1700 = scalar_lea.vmem [#allocation5], %s1699
          %1702 = dma.done %s1697, 32
        $region96: #{tpu_custom_call.1} parent=87 // pred_fallthru
          _
      $region88: #{tpu_custom_call.1} parent=5 // pred_fallthru
        _
    $region6: #{tpu_custom_call.1} parent=1 // loop_footer
      %s34 = sadd.s32 1, %s30
    $region7: #{tpu_custom_call.1} parent=1 // loop_footer_branch
      %29 = sbr.rel target = $region3
    $region8: #{tpu_custom_call.1} parent=1 // loop_exit
      _
    %1703 = vsyncpa [#allocation4], 1
    %s1704 = scalar_lea.sflag [#allocation4], 1
    %1705 = vsyncpa %s1704, 1
    %1706 = vsyncpa [#allocation6], 1
    %s1707 = scalar_lea.sflag [#allocation6], 1
    %1708 = vsyncpa %s1707, 1

</llo_original>
